<compile_context>
chip_gen: v6e
topology: v6e:2x2x1
jax: 0.10.0
libtpu: 0.0.40
codegen_flags: <defaults>
</compile_context>

<pallas_src>
import functools

import numpy as np
import jax
import jax.numpy as jnp
from jax.experimental import pallas as pl
from jax.experimental.pallas import tpu as pltpu


KSIZE = 3
PAD = 1
STRIDES = (2, 2, 2, 1)       # FPN_Tiny(in_shape, [2, 2, 2, 1])
BN_EPS = 1e-5


# ---------------------------------------------------------------------------
# Host-side constant 0/1 matrices (tiny, passed as kernel inputs)
# ---------------------------------------------------------------------------

def _stage_lengths(l0):
    louts, lin = [], l0
    for s in STRIDES:
        louts.append((lin + 2 * PAD - KSIZE) // s + 1)
        lin = louts[-1]
    return louts


def _make_selection(lin, lout, stride, n):
    """(K, n*lin, n*lout) block-diagonal gather matrices.

    Right-multiplying a channel-major activation slab H (C, n*lin) by S_k
    yields, for every batch element at once, the tap-k strided & zero-padded
    input columns: (H @ S_k)[c, b*lout + j] = H[c, b*lin + j*stride + k - PAD]
    (0 when the index falls in the padding)."""
    sel = np.zeros((KSIZE, n * lin, n * lout), np.float32)
    for k in range(KSIZE):
        for b in range(n):
            for j in range(lout):
                i = j * stride + k - PAD
                if 0 <= i < lin:
                    sel[k, b * lin + i, b * lout + j] = 1.0
    return sel


def _make_placements(louts, n):
    """Per-stage (n*lout_i, n*Ltot) scatter matrices implementing the
    per-batch concatenation of the stage outputs along the length axis."""
    ltot = sum(louts)
    mats, off = [], 0
    for lo in louts:
        p = np.zeros((n * lo, n * ltot), np.float32)
        for b in range(n):
            for j in range(lo):
                p[b * lo + j, b * ltot + off + j] = 1.0
        mats.append(p)
        off += lo
    return mats


# ---------------------------------------------------------------------------
# Fused Pallas kernel: 4x (conv1d + bias + ReLU) -> concat -> BatchNorm1d
# ---------------------------------------------------------------------------

def _fused_routing_kernel(x_ref, w_ref, b_ref,
                          s0_ref, s1_ref, s2_ref, s3_ref,
                          p0_ref, p1_ref, p2_ref, p3_ref,
                          g_ref, beta_ref, o_ref, *, cout, eps):
    """Everything resident in VMEM, single lane-dense output store.

    x_ref : (C, N*L0)                channel-major input slab
    w_ref : (n_stages, K*C, C)       tap-major stacked conv weights
    b_ref : (n_stages, C, 1)         conv biases
    s*_ref: (K, N*Lin_i, N*Lout_i)   per-tap gather (pad+stride) matrices
    p*_ref: (N*Lout_i, N*Ltot)       concat placement matrices
    g_ref, beta_ref: (C, 1)          BatchNorm affine params
    o_ref : (C, N*Ltot)              normalized feature pyramid slab
    """
    sel_refs = (s0_ref, s1_ref, s2_ref, s3_ref)
    plc_refs = (p0_ref, p1_ref, p2_ref, p3_ref)

    h = x_ref[...]                                   # (C, N*L0)
    y = None                                         # fused pyramid slab
    for i in range(len(STRIDES)):
        # All K taps at once: rows [k*C:(k+1)*C] of p equal W_k @ h.
        p = jnp.dot(w_ref[i], h, preferred_element_type=jnp.float32)
        s_i = sel_refs[i]
        acc = jnp.dot(p[0:cout], s_i[0], preferred_element_type=jnp.float32)
        for k in range(1, KSIZE):
            acc = acc + jnp.dot(p[k * cout:(k + 1) * cout], s_i[k],
                                preferred_element_type=jnp.float32)
        h = jnp.maximum(acc + b_ref[i], 0.0)         # bias + ReLU, (C, N*Lout)
        # Scatter this stage's output into its slot of the concatenated slab.
        contrib = jnp.dot(h, plc_refs[i][...],
                          preferred_element_type=jnp.float32)
        y = contrib if y is None else y + contrib

    # BatchNorm1d over (N, Ltot) per channel == over the lane axis here.
    # Single pass: var = E[x^2] - mean^2 (PyTorch training-mode batch stats).
    cnt = float(o_ref.shape[1])
    mean = jnp.sum(y, axis=1, keepdims=True) / cnt
    ex2 = jnp.sum(y * y, axis=1, keepdims=True) / cnt
    inv = jax.lax.rsqrt(ex2 - mean * mean + eps)
    o_ref[...] = (y - mean) * inv * g_ref[...] + beta_ref[...]


# ---------------------------------------------------------------------------
# Module wrapper
# ---------------------------------------------------------------------------

class RoutingBlockVectorPallas:
    """Pallas port of RoutingBlockVector(in_shape, 'Tiny_FPN')."""

    def __init__(self, in_shape, key):
        c, l = in_shape
        self.c, self.l = c, l
        n_stages = len(STRIDES)
        keys = jax.random.split(key, 2 * n_stages)
        ws, bs = [], []
        for i in range(n_stages):
            # (K, Cout, Cin) conv weight, stacked tap-major to (K*Cout, Cin)
            w = 0.1 * jax.random.normal(keys[2 * i], (KSIZE, c, c),
                                        dtype=jnp.float32)
            b = 0.1 * jax.random.normal(keys[2 * i + 1], (c, 1),
                                        dtype=jnp.float32)
            ws.append(w.reshape(KSIZE * c, c))
            bs.append(b)
        self.w = jnp.stack(ws)                       # (n_stages, K*C, C)
        self.b = jnp.stack(bs)                       # (n_stages, C, 1)
        # BatchNorm1d(in_shape[0]) default init: weight=1, bias=0
        self.bn_gamma = jnp.ones((c, 1), dtype=jnp.float32)
        self.bn_beta = jnp.zeros((c, 1), dtype=jnp.float32)

    def __call__(self, x):
        n, c, l = x.shape
        assert (c, l) == (self.c, self.l), (x.shape, (self.c, self.l))
        louts = _stage_lengths(l)
        ltot = sum(louts)
        lins = [l] + louts[:-1]

        # Compile-time 0/1 gather / scatter matrices (a few KB total).
        sels = [jnp.asarray(_make_selection(lin, lout, s, n))
                for lin, lout, s in zip(lins, louts, STRIDES)]
        plcs = [jnp.asarray(p) for p in _make_placements(louts, n)]

        # Layout plumbing only: fold batch into the lane axis -> (C, N*L).
        xc = jnp.transpose(x, (1, 0, 2)).reshape(c, n * l)

        args = (xc, self.w, self.b, *sels, *plcs, self.bn_gamma, self.bn_beta)

        # Advisory cost estimate so XLA schedules the tiny custom call sanely.
        flops = 0
        for lin, lout in zip(lins, louts):
            flops += 2 * (KSIZE * c) * c * (n * lin)          # W_stack @ h
            flops += KSIZE * 2 * c * (n * lin) * (n * lout)   # tap gathers
            flops += 2 * c * (n * lout) * (n * ltot)          # concat scatter
        bytes_accessed = 4 * (sum(a.size for a in args) + c * n * ltot)

        kernel = functools.partial(_fused_routing_kernel, cout=c, eps=BN_EPS)
        yc = pl.pallas_call(
            kernel,
            out_shape=jax.ShapeDtypeStruct((c, n * ltot), jnp.float32),
            in_specs=[pl.BlockSpec(memory_space=pltpu.MemorySpace.VMEM)
                      for _ in args],
            out_specs=pl.BlockSpec(memory_space=pltpu.MemorySpace.VMEM),
            cost_estimate=pl.CostEstimate(flops=flops, transcendentals=c,
                                          bytes_accessed=bytes_accessed),
        )(*args)

        # Layout plumbing back to PyTorch's (N, C, Ltot).
        return yc.reshape(c, n, ltot).transpose(1, 0, 2)


# ---------------------------------------------------------------------------
# Pure-JAX (non-Pallas) reference with identical semantics, for validation
# ---------------------------------------------------------------------------

def _reference_forward(x, module):
    n, c, _ = x.shape
    h = x
    feats = []
    for i, s in enumerate(STRIDES):
        w = module.w[i].reshape(KSIZE, c, c)        # (K, Cout, Cin)
        b = module.b[i]                             # (C, 1)
        lin = h.shape[2]
        lout = (lin + 2 * PAD - KSIZE) // s + 1
        xp = jnp.pad(h, ((0, 0), (0, 0), (PAD, PAD)))
        acc = jnp.zeros((n, c, lout), jnp.float32)
        for k in range(KSIZE):
            xk = xp[:, :, k:k + (lout - 1) * s + 1:s]          # (N, Cin, Lout)
            acc = acc + jnp.einsum('oi,nil->nol', w[k], xk)
        h = jnp.maximum(acc + b[None], 0.0)
        feats.append(h)
    y = jnp.concatenate(feats, axis=2)
    mean = jnp.mean(y, axis=(0, 2), keepdims=True)
    var = jnp.mean((y - mean) ** 2, axis=(0, 2), keepdims=True)
    return ((y - mean) * jax.lax.rsqrt(var + BN_EPS)
            * module.bn_gamma[None] + module.bn_beta[None])


# ---------------------------------------------------------------------------
# Main
# ---------------------------------------------------------------------------

if __name__ == "__main__":
    key = jax.random.PRNGKey(0)
    k_x, k_params = jax.random.split(key)

    # in_shape = (channels, length); x is (batch, channels, length)
    in_shape = (4, 16)
    batch = 2
    x = jax.random.normal(k_x, (batch, in_shape[0], in_shape[1]),
                          dtype=jnp.float32)

    module = RoutingBlockVectorPallas(in_shape, k_params)
    out = jax.block_until_ready(module(x))

    louts = _stage_lengths(in_shape[1])
    assert out.shape == (batch, in_shape[0], sum(louts)), out.shape
    assert out.dtype == jnp.float32

    ref = jax.block_until_ready(_reference_forward(x, module))
    assert np.allclose(np.asarray(out), np.asarray(ref), rtol=1e-2, atol=1e-2), \
        float(np.max(np.abs(np.asarray(out) - np.asarray(ref))))

    print("KERNEL_OK")
</pallas_src>

<mosaic_0001>
module attributes {stable_mosaic.version = 11 : i64} {
  func.func @_fused_routing_kernel(%arg0: memref<4x32xf32, #tpu.memory_space<vmem>>, %arg1: memref<4x12x4xf32, #tpu.memory_space<vmem>>, %arg2: memref<4x4x1xf32, #tpu.memory_space<vmem>>, %arg3: memref<3x32x16xf32, #tpu.memory_space<vmem>>, %arg4: memref<3x16x8xf32, #tpu.memory_space<vmem>>, %arg5: memref<3x8x4xf32, #tpu.memory_space<vmem>>, %arg6: memref<3x4x4xf32, #tpu.memory_space<vmem>>, %arg7: memref<16x32xf32, #tpu.memory_space<vmem>>, %arg8: memref<8x32xf32, #tpu.memory_space<vmem>>, %arg9: memref<4x32xf32, #tpu.memory_space<vmem>>, %arg10: memref<4x32xf32, #tpu.memory_space<vmem>>, %arg11: memref<4x1xf32, #tpu.memory_space<vmem>>, %arg12: memref<4x1xf32, #tpu.memory_space<vmem>>, %arg13: memref<4x32xf32, #tpu.memory_space<vmem>>) attributes {dimension_semantics = [], scalar_prefetch = 0 : i64, scratch_operands = 0 : i64, tpu.core_type = #tpu.core_type<tc>} {
    %c0 = arith.constant 0 : index
    %c0_0 = arith.constant 0 : index
    %0 = vector.load %arg0[%c0, %c0_0] : memref<4x32xf32, #tpu.memory_space<vmem>>, vector<4x32xf32>
    %c0_1 = arith.constant 0 : index
    %c0_2 = arith.constant 0 : index
    %c0_3 = arith.constant 0 : index
    %1 = vector.load %arg1[%c0_1, %c0_2, %c0_3] : memref<4x12x4xf32, #tpu.memory_space<vmem>>, vector<1x12x4xf32>
    %2 = vector.shape_cast %1 : vector<1x12x4xf32> to vector<12x4xf32>
    %cst = arith.constant dense<0.000000e+00> : vector<12x32xf32>
    %3 = tpu.matmul %2, %0, %cst {dimension_numbers = #tpu.dot_dimension_numbers<[1], [0], [0], [1], [0, 0, 1, 1], [], []>} : vector<12x4xf32>, vector<4x32xf32>, vector<12x32xf32> -> vector<12x32xf32>
    %4 = vector.extract_strided_slice %3 {offsets = [0, 0], sizes = [4, 32], strides = [1, 1]} : vector<12x32xf32> to vector<4x32xf32>
    %c0_4 = arith.constant 0 : index
    %c0_5 = arith.constant 0 : index
    %c0_6 = arith.constant 0 : index
    %5 = vector.load %arg3[%c0_4, %c0_5, %c0_6] : memref<3x32x16xf32, #tpu.memory_space<vmem>>, vector<1x32x16xf32>
    %6 = vector.shape_cast %5 : vector<1x32x16xf32> to vector<32x16xf32>
    %cst_7 = arith.constant dense<0.000000e+00> : vector<4x16xf32>
    %7 = tpu.matmul %4, %6, %cst_7 {dimension_numbers = #tpu.dot_dimension_numbers<[1], [0], [0], [1], [0, 0, 1, 1], [], []>} : vector<4x32xf32>, vector<32x16xf32>, vector<4x16xf32> -> vector<4x16xf32>
    %8 = vector.extract_strided_slice %3 {offsets = [4, 0], sizes = [4, 32], strides = [1, 1]} : vector<12x32xf32> to vector<4x32xf32>
    %c1 = arith.constant 1 : index
    %c0_8 = arith.constant 0 : index
    %c0_9 = arith.constant 0 : index
    %9 = vector.load %arg3[%c1, %c0_8, %c0_9] : memref<3x32x16xf32, #tpu.memory_space<vmem>>, vector<1x32x16xf32>
    %10 = vector.shape_cast %9 : vector<1x32x16xf32> to vector<32x16xf32>
    %cst_10 = arith.constant dense<0.000000e+00> : vector<4x16xf32>
    %11 = tpu.matmul %8, %10, %cst_10 {dimension_numbers = #tpu.dot_dimension_numbers<[1], [0], [0], [1], [0, 0, 1, 1], [], []>} : vector<4x32xf32>, vector<32x16xf32>, vector<4x16xf32> -> vector<4x16xf32>
    %12 = arith.addf %7, %11 : vector<4x16xf32>
    %13 = vector.extract_strided_slice %3 {offsets = [8, 0], sizes = [4, 32], strides = [1, 1]} : vector<12x32xf32> to vector<4x32xf32>
    %c2 = arith.constant 2 : index
    %c0_11 = arith.constant 0 : index
    %c0_12 = arith.constant 0 : index
    %14 = vector.load %arg3[%c2, %c0_11, %c0_12] : memref<3x32x16xf32, #tpu.memory_space<vmem>>, vector<1x32x16xf32>
    %15 = vector.shape_cast %14 : vector<1x32x16xf32> to vector<32x16xf32>
    %cst_13 = arith.constant dense<0.000000e+00> : vector<4x16xf32>
    %16 = tpu.matmul %13, %15, %cst_13 {dimension_numbers = #tpu.dot_dimension_numbers<[1], [0], [0], [1], [0, 0, 1, 1], [], []>} : vector<4x32xf32>, vector<32x16xf32>, vector<4x16xf32> -> vector<4x16xf32>
    %17 = arith.addf %12, %16 : vector<4x16xf32>
    %c0_14 = arith.constant 0 : index
    %c0_15 = arith.constant 0 : index
    %c0_16 = arith.constant 0 : index
    %18 = vector.load %arg2[%c0_14, %c0_15, %c0_16] : memref<4x4x1xf32, #tpu.memory_space<vmem>>, vector<1x4x1xf32>
    %19 = vector.shape_cast %18 : vector<1x4x1xf32> to vector<4x1xf32>
    %20 = vector.broadcast %19 : vector<4x1xf32> to vector<4x16xf32>
    %21 = arith.addf %17, %20 : vector<4x16xf32>
    %cst_17 = arith.constant 0.000000e+00 : f32
    %22 = vector.broadcast %cst_17 : f32 to vector<4x16xf32>
    %23 = arith.maximumf %21, %22 : vector<4x16xf32>
    %c0_18 = arith.constant 0 : index
    %c0_19 = arith.constant 0 : index
    %24 = vector.load %arg7[%c0_18, %c0_19] : memref<16x32xf32, #tpu.memory_space<vmem>>, vector<16x32xf32>
    %cst_20 = arith.constant dense<0.000000e+00> : vector<4x32xf32>
    %25 = tpu.matmul %23, %24, %cst_20 {dimension_numbers = #tpu.dot_dimension_numbers<[1], [0], [0], [1], [0, 0, 1, 1], [], []>} : vector<4x16xf32>, vector<16x32xf32>, vector<4x32xf32> -> vector<4x32xf32>
    %c1_21 = arith.constant 1 : index
    %c0_22 = arith.constant 0 : index
    %c0_23 = arith.constant 0 : index
    %26 = vector.load %arg1[%c1_21, %c0_22, %c0_23] : memref<4x12x4xf32, #tpu.memory_space<vmem>>, vector<1x12x4xf32>
    %27 = vector.shape_cast %26 : vector<1x12x4xf32> to vector<12x4xf32>
    %cst_24 = arith.constant dense<0.000000e+00> : vector<12x16xf32>
    %28 = tpu.matmul %27, %23, %cst_24 {dimension_numbers = #tpu.dot_dimension_numbers<[1], [0], [0], [1], [0, 0, 1, 1], [], []>} : vector<12x4xf32>, vector<4x16xf32>, vector<12x16xf32> -> vector<12x16xf32>
    %29 = vector.extract_strided_slice %28 {offsets = [0, 0], sizes = [4, 16], strides = [1, 1]} : vector<12x16xf32> to vector<4x16xf32>
    %c0_25 = arith.constant 0 : index
    %c0_26 = arith.constant 0 : index
    %c0_27 = arith.constant 0 : index
    %30 = vector.load %arg4[%c0_25, %c0_26, %c0_27] : memref<3x16x8xf32, #tpu.memory_space<vmem>>, vector<1x16x8xf32>
    %31 = vector.shape_cast %30 : vector<1x16x8xf32> to vector<16x8xf32>
    %cst_28 = arith.constant dense<0.000000e+00> : vector<4x8xf32>
    %32 = tpu.matmul %29, %31, %cst_28 {dimension_numbers = #tpu.dot_dimension_numbers<[1], [0], [0], [1], [0, 0, 1, 1], [], []>} : vector<4x16xf32>, vector<16x8xf32>, vector<4x8xf32> -> vector<4x8xf32>
    %33 = vector.extract_strided_slice %28 {offsets = [4, 0], sizes = [4, 16], strides = [1, 1]} : vector<12x16xf32> to vector<4x16xf32>
    %c1_29 = arith.constant 1 : index
    %c0_30 = arith.constant 0 : index
    %c0_31 = arith.constant 0 : index
    %34 = vector.load %arg4[%c1_29, %c0_30, %c0_31] : memref<3x16x8xf32, #tpu.memory_space<vmem>>, vector<1x16x8xf32>
    %35 = vector.shape_cast %34 : vector<1x16x8xf32> to vector<16x8xf32>
    %cst_32 = arith.constant dense<0.000000e+00> : vector<4x8xf32>
    %36 = tpu.matmul %33, %35, %cst_32 {dimension_numbers = #tpu.dot_dimension_numbers<[1], [0], [0], [1], [0, 0, 1, 1], [], []>} : vector<4x16xf32>, vector<16x8xf32>, vector<4x8xf32> -> vector<4x8xf32>
    %37 = arith.addf %32, %36 : vector<4x8xf32>
    %38 = vector.extract_strided_slice %28 {offsets = [8, 0], sizes = [4, 16], strides = [1, 1]} : vector<12x16xf32> to vector<4x16xf32>
    %c2_33 = arith.constant 2 : index
    %c0_34 = arith.constant 0 : index
    %c0_35 = arith.constant 0 : index
    %39 = vector.load %arg4[%c2_33, %c0_34, %c0_35] : memref<3x16x8xf32, #tpu.memory_space<vmem>>, vector<1x16x8xf32>
    %40 = vector.shape_cast %39 : vector<1x16x8xf32> to vector<16x8xf32>
    %cst_36 = arith.constant dense<0.000000e+00> : vector<4x8xf32>
    %41 = tpu.matmul %38, %40, %cst_36 {dimension_numbers = #tpu.dot_dimension_numbers<[1], [0], [0], [1], [0, 0, 1, 1], [], []>} : vector<4x16xf32>, vector<16x8xf32>, vector<4x8xf32> -> vector<4x8xf32>
    %42 = arith.addf %37, %41 : vector<4x8xf32>
    %c1_37 = arith.constant 1 : index
    %c0_38 = arith.constant 0 : index
    %c0_39 = arith.constant 0 : index
    %43 = vector.load %arg2[%c1_37, %c0_38, %c0_39] : memref<4x4x1xf32, #tpu.memory_space<vmem>>, vector<1x4x1xf32>
    %44 = vector.shape_cast %43 : vector<1x4x1xf32> to vector<4x1xf32>
    %45 = vector.broadcast %44 : vector<4x1xf32> to vector<4x8xf32>
    %46 = arith.addf %42, %45 : vector<4x8xf32>
    %cst_40 = arith.constant 0.000000e+00 : f32
    %47 = vector.broadcast %cst_40 : f32 to vector<4x8xf32>
    %48 = arith.maximumf %46, %47 : vector<4x8xf32>
    %c0_41 = arith.constant 0 : index
    %c0_42 = arith.constant 0 : index
    %49 = vector.load %arg8[%c0_41, %c0_42] : memref<8x32xf32, #tpu.memory_space<vmem>>, vector<8x32xf32>
    %cst_43 = arith.constant dense<0.000000e+00> : vector<4x32xf32>
    %50 = tpu.matmul %48, %49, %cst_43 {dimension_numbers = #tpu.dot_dimension_numbers<[1], [0], [0], [1], [0, 0, 1, 1], [], []>} : vector<4x8xf32>, vector<8x32xf32>, vector<4x32xf32> -> vector<4x32xf32>
    %51 = arith.addf %25, %50 : vector<4x32xf32>
    %c2_44 = arith.constant 2 : index
    %c0_45 = arith.constant 0 : index
    %c0_46 = arith.constant 0 : index
    %52 = vector.load %arg1[%c2_44, %c0_45, %c0_46] : memref<4x12x4xf32, #tpu.memory_space<vmem>>, vector<1x12x4xf32>
    %53 = vector.shape_cast %52 : vector<1x12x4xf32> to vector<12x4xf32>
    %cst_47 = arith.constant dense<0.000000e+00> : vector<12x8xf32>
    %54 = tpu.matmul %53, %48, %cst_47 {dimension_numbers = #tpu.dot_dimension_numbers<[1], [0], [0], [1], [0, 0, 1, 1], [], []>} : vector<12x4xf32>, vector<4x8xf32>, vector<12x8xf32> -> vector<12x8xf32>
    %55 = vector.extract_strided_slice %54 {offsets = [0, 0], sizes = [4, 8], strides = [1, 1]} : vector<12x8xf32> to vector<4x8xf32>
    %c0_48 = arith.constant 0 : index
    %c0_49 = arith.constant 0 : index
    %c0_50 = arith.constant 0 : index
    %56 = vector.load %arg5[%c0_48, %c0_49, %c0_50] : memref<3x8x4xf32, #tpu.memory_space<vmem>>, vector<1x8x4xf32>
    %57 = vector.shape_cast %56 : vector<1x8x4xf32> to vector<8x4xf32>
    %cst_51 = arith.constant dense<0.000000e+00> : vector<4x4xf32>
    %58 = tpu.matmul %55, %57, %cst_51 {dimension_numbers = #tpu.dot_dimension_numbers<[1], [0], [0], [1], [0, 0, 1, 1], [], []>} : vector<4x8xf32>, vector<8x4xf32>, vector<4x4xf32> -> vector<4x4xf32>
    %59 = vector.extract_strided_slice %54 {offsets = [4, 0], sizes = [4, 8], strides = [1, 1]} : vector<12x8xf32> to vector<4x8xf32>
    %c1_52 = arith.constant 1 : index
    %c0_53 = arith.constant 0 : index
    %c0_54 = arith.constant 0 : index
    %60 = vector.load %arg5[%c1_52, %c0_53, %c0_54] : memref<3x8x4xf32, #tpu.memory_space<vmem>>, vector<1x8x4xf32>
    %61 = vector.shape_cast %60 : vector<1x8x4xf32> to vector<8x4xf32>
    %cst_55 = arith.constant dense<0.000000e+00> : vector<4x4xf32>
    %62 = tpu.matmul %59, %61, %cst_55 {dimension_numbers = #tpu.dot_dimension_numbers<[1], [0], [0], [1], [0, 0, 1, 1], [], []>} : vector<4x8xf32>, vector<8x4xf32>, vector<4x4xf32> -> vector<4x4xf32>
    %63 = arith.addf %58, %62 : vector<4x4xf32>
    %64 = vector.extract_strided_slice %54 {offsets = [8, 0], sizes = [4, 8], strides = [1, 1]} : vector<12x8xf32> to vector<4x8xf32>
    %c2_56 = arith.constant 2 : index
    %c0_57 = arith.constant 0 : index
    %c0_58 = arith.constant 0 : index
    %65 = vector.load %arg5[%c2_56, %c0_57, %c0_58] : memref<3x8x4xf32, #tpu.memory_space<vmem>>, vector<1x8x4xf32>
    %66 = vector.shape_cast %65 : vector<1x8x4xf32> to vector<8x4xf32>
    %cst_59 = arith.constant dense<0.000000e+00> : vector<4x4xf32>
    %67 = tpu.matmul %64, %66, %cst_59 {dimension_numbers = #tpu.dot_dimension_numbers<[1], [0], [0], [1], [0, 0, 1, 1], [], []>} : vector<4x8xf32>, vector<8x4xf32>, vector<4x4xf32> -> vector<4x4xf32>
    %68 = arith.addf %63, %67 : vector<4x4xf32>
    %c2_60 = arith.constant 2 : index
    %c0_61 = arith.constant 0 : index
    %c0_62 = arith.constant 0 : index
    %69 = vector.load %arg2[%c2_60, %c0_61, %c0_62] : memref<4x4x1xf32, #tpu.memory_space<vmem>>, vector<1x4x1xf32>
    %70 = vector.shape_cast %69 : vector<1x4x1xf32> to vector<4x1xf32>
    %71 = vector.broadcast %70 : vector<4x1xf32> to vector<4x4xf32>
    %72 = arith.addf %68, %71 : vector<4x4xf32>
    %cst_63 = arith.constant 0.000000e+00 : f32
    %73 = vector.broadcast %cst_63 : f32 to vector<4x4xf32>
    %74 = arith.maximumf %72, %73 : vector<4x4xf32>
    %c0_64 = arith.constant 0 : index
    %c0_65 = arith.constant 0 : index
    %75 = vector.load %arg9[%c0_64, %c0_65] : memref<4x32xf32, #tpu.memory_space<vmem>>, vector<4x32xf32>
    %cst_66 = arith.constant dense<0.000000e+00> : vector<4x32xf32>
    %76 = tpu.matmul %74, %75, %cst_66 {dimension_numbers = #tpu.dot_dimension_numbers<[1], [0], [0], [1], [0, 0, 1, 1], [], []>} : vector<4x4xf32>, vector<4x32xf32>, vector<4x32xf32> -> vector<4x32xf32>
    %77 = arith.addf %51, %76 : vector<4x32xf32>
    %c3 = arith.constant 3 : index
    %c0_67 = arith.constant 0 : index
    %c0_68 = arith.constant 0 : index
    %78 = vector.load %arg1[%c3, %c0_67, %c0_68] : memref<4x12x4xf32, #tpu.memory_space<vmem>>, vector<1x12x4xf32>
    %79 = vector.shape_cast %78 : vector<1x12x4xf32> to vector<12x4xf32>
    %cst_69 = arith.constant dense<0.000000e+00> : vector<12x4xf32>
    %80 = tpu.matmul %79, %74, %cst_69 {dimension_numbers = #tpu.dot_dimension_numbers<[1], [0], [0], [1], [0, 0, 1, 1], [], []>} : vector<12x4xf32>, vector<4x4xf32>, vector<12x4xf32> -> vector<12x4xf32>
    %81 = vector.extract_strided_slice %80 {offsets = [0, 0], sizes = [4, 4], strides = [1, 1]} : vector<12x4xf32> to vector<4x4xf32>
    %c0_70 = arith.constant 0 : index
    %c0_71 = arith.constant 0 : index
    %c0_72 = arith.constant 0 : index
    %82 = vector.load %arg6[%c0_70, %c0_71, %c0_72] : memref<3x4x4xf32, #tpu.memory_space<vmem>>, vector<1x4x4xf32>
    %83 = vector.shape_cast %82 : vector<1x4x4xf32> to vector<4x4xf32>
    %cst_73 = arith.constant dense<0.000000e+00> : vector<4x4xf32>
    %84 = tpu.matmul %81, %83, %cst_73 {dimension_numbers = #tpu.dot_dimension_numbers<[1], [0], [0], [1], [0, 0, 1, 1], [], []>} : vector<4x4xf32>, vector<4x4xf32>, vector<4x4xf32> -> vector<4x4xf32>
    %85 = vector.extract_strided_slice %80 {offsets = [4, 0], sizes = [4, 4], strides = [1, 1]} : vector<12x4xf32> to vector<4x4xf32>
    %c1_74 = arith.constant 1 : index
    %c0_75 = arith.constant 0 : index
    %c0_76 = arith.constant 0 : index
    %86 = vector.load %arg6[%c1_74, %c0_75, %c0_76] : memref<3x4x4xf32, #tpu.memory_space<vmem>>, vector<1x4x4xf32>
    %87 = vector.shape_cast %86 : vector<1x4x4xf32> to vector<4x4xf32>
    %cst_77 = arith.constant dense<0.000000e+00> : vector<4x4xf32>
    %88 = tpu.matmul %85, %87, %cst_77 {dimension_numbers = #tpu.dot_dimension_numbers<[1], [0], [0], [1], [0, 0, 1, 1], [], []>} : vector<4x4xf32>, vector<4x4xf32>, vector<4x4xf32> -> vector<4x4xf32>
    %89 = arith.addf %84, %88 : vector<4x4xf32>
    %90 = vector.extract_strided_slice %80 {offsets = [8, 0], sizes = [4, 4], strides = [1, 1]} : vector<12x4xf32> to vector<4x4xf32>
    %c2_78 = arith.constant 2 : index
    %c0_79 = arith.constant 0 : index
    %c0_80 = arith.constant 0 : index
    %91 = vector.load %arg6[%c2_78, %c0_79, %c0_80] : memref<3x4x4xf32, #tpu.memory_space<vmem>>, vector<1x4x4xf32>
    %92 = vector.shape_cast %91 : vector<1x4x4xf32> to vector<4x4xf32>
    %cst_81 = arith.constant dense<0.000000e+00> : vector<4x4xf32>
    %93 = tpu.matmul %90, %92, %cst_81 {dimension_numbers = #tpu.dot_dimension_numbers<[1], [0], [0], [1], [0, 0, 1, 1], [], []>} : vector<4x4xf32>, vector<4x4xf32>, vector<4x4xf32> -> vector<4x4xf32>
    %94 = arith.addf %89, %93 : vector<4x4xf32>
    %c3_82 = arith.constant 3 : index
    %c0_83 = arith.constant 0 : index
    %c0_84 = arith.constant 0 : index
    %95 = vector.load %arg2[%c3_82, %c0_83, %c0_84] : memref<4x4x1xf32, #tpu.memory_space<vmem>>, vector<1x4x1xf32>
    %96 = vector.shape_cast %95 : vector<1x4x1xf32> to vector<4x1xf32>
    %97 = vector.broadcast %96 : vector<4x1xf32> to vector<4x4xf32>
    %98 = arith.addf %94, %97 : vector<4x4xf32>
    %cst_85 = arith.constant 0.000000e+00 : f32
    %99 = vector.broadcast %cst_85 : f32 to vector<4x4xf32>
    %100 = arith.maximumf %98, %99 : vector<4x4xf32>
    %c0_86 = arith.constant 0 : index
    %c0_87 = arith.constant 0 : index
    %101 = vector.load %arg10[%c0_86, %c0_87] : memref<4x32xf32, #tpu.memory_space<vmem>>, vector<4x32xf32>
    %cst_88 = arith.constant dense<0.000000e+00> : vector<4x32xf32>
    %102 = tpu.matmul %100, %101, %cst_88 {dimension_numbers = #tpu.dot_dimension_numbers<[1], [0], [0], [1], [0, 0, 1, 1], [], []>} : vector<4x4xf32>, vector<4x32xf32>, vector<4x32xf32> -> vector<4x32xf32>
    %103 = arith.addf %77, %102 : vector<4x32xf32>
    %cst_89 = arith.constant dense<0.000000e+00> : vector<4xf32>
    %104 = vector.multi_reduction <add>, %103, %cst_89 [1] : vector<4x32xf32> to vector<4xf32>
    %105 = vector.shape_cast %104 : vector<4xf32> to vector<4x1xf32>
    %cst_90 = arith.constant 3.200000e+01 : f32
    %106 = vector.broadcast %cst_90 : f32 to vector<4x1xf32>
    %107 = arith.divf %105, %106 : vector<4x1xf32>
    %108 = arith.mulf %103, %103 : vector<4x32xf32>
    %cst_91 = arith.constant dense<0.000000e+00> : vector<4xf32>
    %109 = vector.multi_reduction <add>, %108, %cst_91 [1] : vector<4x32xf32> to vector<4xf32>
    %110 = vector.shape_cast %109 : vector<4xf32> to vector<4x1xf32>
    %cst_92 = arith.constant 3.200000e+01 : f32
    %111 = vector.broadcast %cst_92 : f32 to vector<4x1xf32>
    %112 = arith.divf %110, %111 : vector<4x1xf32>
    %113 = arith.mulf %107, %107 : vector<4x1xf32>
    %114 = arith.subf %112, %113 : vector<4x1xf32>
    %cst_93 = arith.constant 9.99999974E-6 : f32
    %115 = vector.broadcast %cst_93 : f32 to vector<4x1xf32>
    %116 = arith.addf %114, %115 : vector<4x1xf32>
    %117 = math.rsqrt %116 : vector<4x1xf32>
    %118 = vector.broadcast %107 : vector<4x1xf32> to vector<4x32xf32>
    %119 = arith.subf %103, %118 : vector<4x32xf32>
    %120 = vector.broadcast %117 : vector<4x1xf32> to vector<4x32xf32>
    %121 = arith.mulf %119, %120 : vector<4x32xf32>
    %c0_94 = arith.constant 0 : index
    %c0_95 = arith.constant 0 : index
    %122 = vector.load %arg11[%c0_94, %c0_95] : memref<4x1xf32, #tpu.memory_space<vmem>>, vector<4x1xf32>
    %123 = vector.broadcast %122 : vector<4x1xf32> to vector<4x32xf32>
    %124 = arith.mulf %121, %123 : vector<4x32xf32>
    %c0_96 = arith.constant 0 : index
    %c0_97 = arith.constant 0 : index
    %125 = vector.load %arg12[%c0_96, %c0_97] : memref<4x1xf32, #tpu.memory_space<vmem>>, vector<4x1xf32>
    %126 = vector.broadcast %125 : vector<4x1xf32> to vector<4x32xf32>
    %127 = arith.addf %124, %126 : vector<4x32xf32>
    %c0_98 = arith.constant 0 : index
    %c0_99 = arith.constant 0 : index
    %128 = vector.load %arg13[%c0_98, %c0_99] : memref<4x32xf32, #tpu.memory_space<vmem>>, vector<4x32xf32>
    tpu.vector_store %arg13[%c0_98, %c0_99], %127 {strides = array<i32>} : memref<4x32xf32, #tpu.memory_space<vmem>>, vector<4x32xf32>,
    return
  }
}

</mosaic_0001>

<llo_original>
// kernel: tpu_custom_call.1
$region0: #{tpu_custom_call.1}
  #allocation0 [shape = 'u32[]', space=smem, size = 0x4, offset = 0x4, fixed_abs, tag = 'smem constant byte address 0x4 - core index']
  #allocation1 [shape = 'u32[144,128]{1,0:T(1,128)}', space=vmem, size = 0x12000, scoped, tag = 'internal scratch']
  %s0 = inlined_call_operand.vmem [shape: f32[4,32], index: 0, kind: input, shape index: {}]
  %s1 = inlined_call_operand.vmem [shape: f32[4,12,4], index: 1, kind: input, shape index: {}]
  %s2 = inlined_call_operand.vmem [shape: f32[4,4,1], index: 2, kind: input, shape index: {}]
  %s3 = inlined_call_operand.vmem [shape: f32[3,32,16], index: 3, kind: input, shape index: {}]
  %s4 = inlined_call_operand.vmem [shape: f32[3,16,8], index: 4, kind: input, shape index: {}]
  %s5 = inlined_call_operand.vmem [shape: f32[3,8,4], index: 5, kind: input, shape index: {}]
  %s6 = inlined_call_operand.vmem [shape: f32[3,4,4], index: 6, kind: input, shape index: {}]
  %s7 = inlined_call_operand.vmem [shape: f32[16,32], index: 7, kind: input, shape index: {}]
  %s8 = inlined_call_operand.vmem [shape: f32[8,32], index: 8, kind: input, shape index: {}]
  %s9 = inlined_call_operand.vmem [shape: f32[4,32], index: 9, kind: input, shape index: {}]
  %s10 = inlined_call_operand.vmem [shape: f32[4,32], index: 10, kind: input, shape index: {}]
  %s11 = inlined_call_operand.vmem [shape: f32[4,1], index: 11, kind: input, shape index: {}]
  %s12 = inlined_call_operand.vmem [shape: f32[4,1], index: 12, kind: input, shape index: {}]
  %s13 = inlined_call_operand.hbm [shape: f32[4,32], index: 13, kind: output, shape index: {}]
  %s14 = sld [smem:[#allocation0]]
  $region62: #{tpu_custom_call.1} parent=0
    _
  %s16 = ssub.s32 1, %s14
  %s17 = scalar_select 0, %s16, %s14
  $region1: #{tpu_custom_call.1} parent=0
    #allocation2 [shape = 'u8[2048]{0}', space=vmem, size = 0x800, scoped, tag = 'output window, operand 0, single buffered']
    #allocation3 [shape = 's32[1]{0}', space=sflag, size = 0x4, scoped, tag = 'scoped memory for tpu_custom_call.1']
    %18 = vsyncpa [#allocation3], 0
    // Predicated region
    $region2: #{tpu_custom_call.1} parent=1 // pred_check
      _
    $region3: #{tpu_custom_call.1} parent=1 // pred_check_branch
      %20 = sbr.rel (0) target = $region5
    $region4: #{tpu_custom_call.1} parent=1 // pred_region
      _
    $region5: #{tpu_custom_call.1} parent=1 // pred_fallthru
      _
    // Predicated region
    $region6: #{tpu_custom_call.1} parent=1 // pred_check
      _
    $region7: #{tpu_custom_call.1} parent=1 // pred_check_branch
      %22 = sbr.rel (0) target = $region9
    $region8: #{tpu_custom_call.1} parent=1 // pred_region
      _
    $region9: #{tpu_custom_call.1} parent=1 // pred_fallthru
      _
    // Predicated region
    $region10: #{tpu_custom_call.1} parent=1 // pred_check
      _
    $region11: #{tpu_custom_call.1} parent=1 // pred_check_branch
      %24 = sbr.rel (0) target = $region13
    $region12: #{tpu_custom_call.1} parent=1 // pred_region
      _
    $region13: #{tpu_custom_call.1} parent=1 // pred_fallthru
      _
    // Predicated region
    $region14: #{tpu_custom_call.1} parent=1 // pred_check
      _
    $region15: #{tpu_custom_call.1} parent=1 // pred_check_branch
      %26 = sbr.rel (0) target = $region17
    $region16: #{tpu_custom_call.1} parent=1 // pred_region
      _
    $region17: #{tpu_custom_call.1} parent=1 // pred_fallthru
      _
    // Predicated region
    $region18: #{tpu_custom_call.1} parent=1 // pred_check
      _
    $region19: #{tpu_custom_call.1} parent=1 // pred_check_branch
      %28 = sbr.rel (0) target = $region21
    $region20: #{tpu_custom_call.1} parent=1 // pred_region
      _
    $region21: #{tpu_custom_call.1} parent=1 // pred_fallthru
      _
    // Predicated region
    $region22: #{tpu_custom_call.1} parent=1 // pred_check
      _
    $region23: #{tpu_custom_call.1} parent=1 // pred_check_branch
      %30 = sbr.rel (0) target = $region25
    $region24: #{tpu_custom_call.1} parent=1 // pred_region
      _
    $region25: #{tpu_custom_call.1} parent=1 // pred_fallthru
      _
    // Predicated region
    $region26: #{tpu_custom_call.1} parent=1 // pred_check
      _
    $region27: #{tpu_custom_call.1} parent=1 // pred_check_branch
      %32 = sbr.rel (0) target = $region29
    $region28: #{tpu_custom_call.1} parent=1 // pred_region
      _
    $region29: #{tpu_custom_call.1} parent=1 // pred_fallthru
      _
    // Predicated region
    $region30: #{tpu_custom_call.1} parent=1 // pred_check
      _
    $region31: #{tpu_custom_call.1} parent=1 // pred_check_branch
      %34 = sbr.rel (0) target = $region33
    $region32: #{tpu_custom_call.1} parent=1 // pred_region
      _
    $region33: #{tpu_custom_call.1} parent=1 // pred_fallthru
      _
    // Predicated region
    $region34: #{tpu_custom_call.1} parent=1 // pred_check
      _
    $region35: #{tpu_custom_call.1} parent=1 // pred_check_branch
      %36 = sbr.rel (0) target = $region37
    $region36: #{tpu_custom_call.1} parent=1 // pred_region
      _
    $region37: #{tpu_custom_call.1} parent=1 // pred_fallthru
      _
    // Predicated region
    $region38: #{tpu_custom_call.1} parent=1 // pred_check
      _
    $region39: #{tpu_custom_call.1} parent=1 // pred_check_branch
      %38 = sbr.rel (0) target = $region41
    $region40: #{tpu_custom_call.1} parent=1 // pred_region
      _
    $region41: #{tpu_custom_call.1} parent=1 // pred_fallthru
      _
    // Predicated region
    $region42: #{tpu_custom_call.1} parent=1 // pred_check
      _
    $region43: #{tpu_custom_call.1} parent=1 // pred_check_branch
      %40 = sbr.rel (0) target = $region45
    $region44: #{tpu_custom_call.1} parent=1 // pred_region
      _
    $region45: #{tpu_custom_call.1} parent=1 // pred_fallthru
      _
    // Predicated region
    $region46: #{tpu_custom_call.1} parent=1 // pred_check
      _
    $region47: #{tpu_custom_call.1} parent=1 // pred_check_branch
      %42 = sbr.rel (0) target = $region49
    $region48: #{tpu_custom_call.1} parent=1 // pred_region
      _
    $region49: #{tpu_custom_call.1} parent=1 // pred_fallthru
      _
    // Predicated region
    $region50: #{tpu_custom_call.1} parent=1 // pred_check
      _
    $region51: #{tpu_custom_call.1} parent=1 // pred_check_branch
      %44 = sbr.rel (0) target = $region53
    $region52: #{tpu_custom_call.1} parent=1 // pred_region
      _
    $region53: #{tpu_custom_call.1} parent=1 // pred_fallthru
      _
    %v45 = vld [vmem:[%s0] sm:$0xf]
    %v46 = vld [vmem:[%s1] sm:$0xff]
    %v47 = vld [vmem:[%s1 + $0x8] sm:$0xf]
    %vm48 = vcmask 31744
    %v50 = vsel %vm48, %v46, 0
    %v53 = vsel %vm48, %v47, 0
    %vm55 = vcmask 1043456
    %v57 = vsel %vm55, %v45, 0
    %59 = vmatprep.subr.mxu0 0.0
    %60 = vmatpush1.msra.mxu0 0.0
    %61 = vmatprep.subr.mxu0 0.0
    %62 = vmatpush1.msra.mxu0 0.0
    %63 = vmatprep.subr.mxu0 0.0
    %64 = vmatpush1.msra.mxu0 0.0
    %65 = vmatprep.subr.mxu0 0.0
    %66 = vmatpush1.msra.mxu0 0.0
    %67 = vmatprep.subr.mxu0 0.0
    %68 = vmatpush1.msra.mxu0 0.0
    %69 = vmatprep.subr.mxu0 0.0
    %70 = vmatpush1.msra.mxu0 0.0
    %71 = vmatprep.subr.mxu0 0.0
    %72 = vmatpush1.msra.mxu0 0.0
    %73 = vmatprep.subr.mxu0 0.0
    %74 = vmatpush1.msra.mxu0 0.0
    %75 = vmatprep.subr.mxu0 0.0
    %76 = vmatpush1.msra.mxu0 0.0
    %77 = vmatprep.subr.mxu0 0.0
    %78 = vmatpush1.msra.mxu0 0.0
    %79 = vmatprep.subr.mxu0 0.0
    %80 = vmatpush1.msra.mxu0 0.0
    %81 = vmatprep.subr.mxu0 0.0
    %82 = vmatpush1.msra.mxu0 0.0
    %83 = vmatprep.subr.mxu0 0.0
    %84 = vmatpush1.msra.mxu0 0.0
    %85 = vmatprep.subr.mxu0 0.0
    %86 = vmatpush1.msra.mxu0 0.0
    %87 = vmatprep.subr.mxu0 0.0
    %88 = vmatpush1.msra.mxu0 0.0
    %89 = vmatprep.subr.mxu0 0.0
    %90 = vmatpush1.msra.mxu0 %v57
    %91 = vmatprep.subr.mxu0 0.0
    %92 = vmatpush2.msra.mxu0 0.0
    %93 = vmatprep.subr.mxu0 0.0
    %94 = vmatpush2.msra.mxu0 0.0
    %95 = vmatprep.subr.mxu0 0.0
    %96 = vmatpush2.msra.mxu0 0.0
    %97 = vmatprep.subr.mxu0 0.0
    %98 = vmatpush2.msra.mxu0 0.0
    %99 = vmatprep.subr.mxu0 0.0
    %100 = vmatpush2.msra.mxu0 0.0
    %101 = vmatprep.subr.mxu0 0.0
    %102 = vmatpush2.msra.mxu0 0.0
    %103 = vmatprep.subr.mxu0 0.0
    %104 = vmatpush2.msra.mxu0 0.0
    %105 = vmatprep.subr.mxu0 0.0
    %106 = vmatpush2.msra.mxu0 0.0
    %107 = vmatprep.subr.mxu0 0.0
    %108 = vmatpush2.msra.mxu0 0.0
    %109 = vmatprep.subr.mxu0 0.0
    %110 = vmatpush2.msra.mxu0 0.0
    %111 = vmatprep.subr.mxu0 0.0
    %112 = vmatpush2.msra.mxu0 0.0
    %113 = vmatprep.subr.mxu0 0.0
    %114 = vmatpush2.msra.mxu0 0.0
    %115 = vmatprep.subr.mxu0 0.0
    %116 = vmatpush2.msra.mxu0 0.0
    %117 = vmatprep.subr.mxu0 0.0
    %118 = vmatpush2.msra.mxu0 0.0
    %119 = vmatprep.subr.mxu0 0.0
    %120 = vmatpush2.msra.mxu0 0.0
    %121 = vmatprep.subr.mxu0 0.0
    %122 = vmatpush2.msra.mxu0 0.0
    %123 = vmatprep.mubr.f32.mxu0 0.0
    %124 = vmatmul.mubr.f32.gmra.mxu0 %v50
    %v125 = vpop.f32.mrf.mxu0
    %v126 = vadd.f32 0.0, %v125
    %v127 = vpop.f32.mrf.mxu0
    %128 = vmatprep.mubr.f32.mxu0 0.0
    %129 = vmatmul.mubr.f32.gmra.mxu0 %v53
    %v130 = vpop.f32.mrf.mxu0
    %v131 = vadd.f32 0.0, %v130
    %v132 = vpop.f32.mrf.mxu0
    %133 = vdwg.mxu0
    %v134 = vld [vmem:[%s3] sm:$0xff]
    %v135 = vld [vmem:[%s3 + $0x8] sm:$0xff]
    %v136 = vld [vmem:[%s3 + $0x10] sm:$0xff]
    %v137 = vld [vmem:[%s3 + $0x18] sm:$0xff]
    %s138 = scalar_lea.vmem %s3, 32
    %v139 = vld [vmem:[%s138] sm:$0xff]
    %v140 = vld [vmem:[%s138 + $0x8] sm:$0xff]
    %v141 = vld [vmem:[%s138 + $0x10] sm:$0xff]
    %v142 = vld [vmem:[%s138 + $0x18] sm:$0xff]
    %v144 = vrot.slane %v126, 4
    %vm145 = vcmask 261120
    %v146 = vsel %vm145, %v144, 0
    %148 = vmatprep.subr.mxu0 0.0
    %149 = vmatpush1.msra.mxu0 0.0
    %150 = vmatprep.subr.mxu0 0.0
    %151 = vmatpush1.msra.mxu0 0.0
    %152 = vmatprep.subr.mxu0 0.0
    %153 = vmatpush1.msra.mxu0 0.0
    %154 = vmatprep.subr.mxu0 0.0
    %155 = vmatpush1.msra.mxu0 0.0
    %156 = vmatprep.subr.mxu0 0.0
    %157 = vmatpush1.msra.mxu0 0.0
    %158 = vmatprep.subr.mxu0 0.0
    %159 = vmatpush1.msra.mxu0 0.0
    %160 = vmatprep.subr.mxu0 0.0
    %161 = vmatpush1.msra.mxu0 0.0
    %162 = vmatprep.subr.mxu0 0.0
    %163 = vmatpush1.msra.mxu0 0.0
    %164 = vmatprep.subr.mxu0 0.0
    %165 = vmatpush1.msra.mxu0 0.0
    %166 = vmatprep.subr.mxu0 0.0
    %167 = vmatpush1.msra.mxu0 0.0
    %168 = vmatprep.subr.mxu0 0.0
    %169 = vmatpush1.msra.mxu0 0.0
    %170 = vmatprep.subr.mxu0 0.0
    %171 = vmatpush1.msra.mxu0 0.0
    %172 = vmatprep.subr.mxu0 0.0
    %173 = vmatpush1.msra.mxu0 %v142
    %174 = vmatprep.subr.mxu0 0.0
    %175 = vmatpush1.msra.mxu0 %v141
    %176 = vmatprep.subr.mxu0 0.0
    %177 = vmatpush1.msra.mxu0 %v140
    %178 = vmatprep.subr.mxu0 0.0
    %179 = vmatpush1.msra.mxu0 %v139
    %180 = vmatprep.subr.mxu0 0.0
    %181 = vmatpush2.msra.mxu0 0.0
    %182 = vmatprep.subr.mxu0 0.0
    %183 = vmatpush2.msra.mxu0 0.0
    %184 = vmatprep.subr.mxu0 0.0
    %185 = vmatpush2.msra.mxu0 0.0
    %186 = vmatprep.subr.mxu0 0.0
    %187 = vmatpush2.msra.mxu0 0.0
    %188 = vmatprep.subr.mxu0 0.0
    %189 = vmatpush2.msra.mxu0 0.0
    %190 = vmatprep.subr.mxu0 0.0
    %191 = vmatpush2.msra.mxu0 0.0
    %192 = vmatprep.subr.mxu0 0.0
    %193 = vmatpush2.msra.mxu0 0.0
    %194 = vmatprep.subr.mxu0 0.0
    %195 = vmatpush2.msra.mxu0 0.0
    %196 = vmatprep.subr.mxu0 0.0
    %197 = vmatpush2.msra.mxu0 0.0
    %198 = vmatprep.subr.mxu0 0.0
    %199 = vmatpush2.msra.mxu0 0.0
    %200 = vmatprep.subr.mxu0 0.0
    %201 = vmatpush2.msra.mxu0 0.0
    %202 = vmatprep.subr.mxu0 0.0
    %203 = vmatpush2.msra.mxu0 0.0
    %204 = vmatprep.subr.mxu0 0.0
    %205 = vmatpush2.msra.mxu0 0.0
    %206 = vmatprep.subr.mxu0 0.0
    %207 = vmatpush2.msra.mxu0 0.0
    %208 = vmatprep.subr.mxu0 0.0
    %209 = vmatpush2.msra.mxu0 0.0
    %210 = vmatprep.subr.mxu0 0.0
    %211 = vmatpush2.msra.mxu0 0.0
    %212 = vmatprep.mubr.f32.mxu0 0.0
    %213 = vmatmul.mubr.f32.gmra.mxu0 %v146
    %v214 = vpop.f32.mrf.mxu0
    %v215 = vadd.f32 0.0, %v214
    %v216 = vpop.f32.mrf.mxu0
    %217 = vdwg.mxu0
    %v218 = vsel %vm145, %v126, 0
    %220 = vmatprep.subr.mxu0 0.0
    %221 = vmatpush1.msra.mxu0 0.0
    %222 = vmatprep.subr.mxu0 0.0
    %223 = vmatpush1.msra.mxu0 0.0
    %224 = vmatprep.subr.mxu0 0.0
    %225 = vmatpush1.msra.mxu0 0.0
    %226 = vmatprep.subr.mxu0 0.0
    %227 = vmatpush1.msra.mxu0 0.0
    %228 = vmatprep.subr.mxu0 0.0
    %229 = vmatpush1.msra.mxu0 0.0
    %230 = vmatprep.subr.mxu0 0.0
    %231 = vmatpush1.msra.mxu0 0.0
    %232 = vmatprep.subr.mxu0 0.0
    %233 = vmatpush1.msra.mxu0 0.0
    %234 = vmatprep.subr.mxu0 0.0
    %235 = vmatpush1.msra.mxu0 0.0
    %236 = vmatprep.subr.mxu0 0.0
    %237 = vmatpush1.msra.mxu0 0.0
    %238 = vmatprep.subr.mxu0 0.0
    %239 = vmatpush1.msra.mxu0 0.0
    %240 = vmatprep.subr.mxu0 0.0
    %241 = vmatpush1.msra.mxu0 0.0
    %242 = vmatprep.subr.mxu0 0.0
    %243 = vmatpush1.msra.mxu0 0.0
    %244 = vmatprep.subr.mxu0 0.0
    %245 = vmatpush1.msra.mxu0 %v137
    %246 = vmatprep.subr.mxu0 0.0
    %247 = vmatpush1.msra.mxu0 %v136
    %248 = vmatprep.subr.mxu0 0.0
    %249 = vmatpush1.msra.mxu0 %v135
    %250 = vmatprep.subr.mxu0 0.0
    %251 = vmatpush1.msra.mxu0 %v134
    %252 = vmatprep.subr.mxu0 0.0
    %253 = vmatpush2.msra.mxu0 0.0
    %254 = vmatprep.subr.mxu0 0.0
    %255 = vmatpush2.msra.mxu0 0.0
    %256 = vmatprep.subr.mxu0 0.0
    %257 = vmatpush2.msra.mxu0 0.0
    %258 = vmatprep.subr.mxu0 0.0
    %259 = vmatpush2.msra.mxu0 0.0
    %260 = vmatprep.subr.mxu0 0.0
    %261 = vmatpush2.msra.mxu0 0.0
    %262 = vmatprep.subr.mxu0 0.0
    %263 = vmatpush2.msra.mxu0 0.0
    %264 = vmatprep.subr.mxu0 0.0
    %265 = vmatpush2.msra.mxu0 0.0
    %266 = vmatprep.subr.mxu0 0.0
    %267 = vmatpush2.msra.mxu0 0.0
    %268 = vmatprep.subr.mxu0 0.0
    %269 = vmatpush2.msra.mxu0 0.0
    %270 = vmatprep.subr.mxu0 0.0
    %271 = vmatpush2.msra.mxu0 0.0
    %272 = vmatprep.subr.mxu0 0.0
    %273 = vmatpush2.msra.mxu0 0.0
    %274 = vmatprep.subr.mxu0 0.0
    %275 = vmatpush2.msra.mxu0 0.0
    %276 = vmatprep.subr.mxu0 0.0
    %277 = vmatpush2.msra.mxu0 0.0
    %278 = vmatprep.subr.mxu0 0.0
    %279 = vmatpush2.msra.mxu0 0.0
    %280 = vmatprep.subr.mxu0 0.0
    %281 = vmatpush2.msra.mxu0 0.0
    %282 = vmatprep.subr.mxu0 0.0
    %283 = vmatpush2.msra.mxu0 0.0
    %284 = vmatprep.mubr.f32.mxu0 0.0
    %285 = vmatmul.mubr.f32.gmra.mxu0 %v218
    %v286 = vpop.f32.mrf.mxu0
    %v287 = vadd.f32 %v215, %v286
    %v288 = vpop.f32.mrf.mxu0
    %289 = vdwg.mxu0
    %s290 = scalar_lea.vmem %s3, 64
    %v291 = vld [vmem:[%s290] sm:$0xff]
    %v292 = vld [vmem:[%s290 + $0x8] sm:$0xff]
    %v293 = vld [vmem:[%s290 + $0x10] sm:$0xff]
    %v294 = vld [vmem:[%s290 + $0x18] sm:$0xff]
    %v296 = vsel %vm145, %v131, 0
    %298 = vmatprep.subr.mxu0 0.0
    %299 = vmatpush1.msra.mxu0 0.0
    %300 = vmatprep.subr.mxu0 0.0
    %301 = vmatpush1.msra.mxu0 0.0
    %302 = vmatprep.subr.mxu0 0.0
    %303 = vmatpush1.msra.mxu0 0.0
    %304 = vmatprep.subr.mxu0 0.0
    %305 = vmatpush1.msra.mxu0 0.0
    %306 = vmatprep.subr.mxu0 0.0
    %307 = vmatpush1.msra.mxu0 0.0
    %308 = vmatprep.subr.mxu0 0.0
    %309 = vmatpush1.msra.mxu0 0.0
    %310 = vmatprep.subr.mxu0 0.0
    %311 = vmatpush1.msra.mxu0 0.0
    %312 = vmatprep.subr.mxu0 0.0
    %313 = vmatpush1.msra.mxu0 0.0
    %314 = vmatprep.subr.mxu0 0.0
    %315 = vmatpush1.msra.mxu0 0.0
    %316 = vmatprep.subr.mxu0 0.0
    %317 = vmatpush1.msra.mxu0 0.0
    %318 = vmatprep.subr.mxu0 0.0
    %319 = vmatpush1.msra.mxu0 0.0
    %320 = vmatprep.subr.mxu0 0.0
    %321 = vmatpush1.msra.mxu0 0.0
    %322 = vmatprep.subr.mxu0 0.0
    %323 = vmatpush1.msra.mxu0 %v294
    %324 = vmatprep.subr.mxu0 0.0
    %325 = vmatpush1.msra.mxu0 %v293
    %326 = vmatprep.subr.mxu0 0.0
    %327 = vmatpush1.msra.mxu0 %v292
    %328 = vmatprep.subr.mxu0 0.0
    %329 = vmatpush1.msra.mxu0 %v291
    %330 = vmatprep.subr.mxu0 0.0
    %331 = vmatpush2.msra.mxu0 0.0
    %332 = vmatprep.subr.mxu0 0.0
    %333 = vmatpush2.msra.mxu0 0.0
    %334 = vmatprep.subr.mxu0 0.0
    %335 = vmatpush2.msra.mxu0 0.0
    %336 = vmatprep.subr.mxu0 0.0
    %337 = vmatpush2.msra.mxu0 0.0
    %338 = vmatprep.subr.mxu0 0.0
    %339 = vmatpush2.msra.mxu0 0.0
    %340 = vmatprep.subr.mxu0 0.0
    %341 = vmatpush2.msra.mxu0 0.0
    %342 = vmatprep.subr.mxu0 0.0
    %343 = vmatpush2.msra.mxu0 0.0
    %344 = vmatprep.subr.mxu0 0.0
    %345 = vmatpush2.msra.mxu0 0.0
    %346 = vmatprep.subr.mxu0 0.0
    %347 = vmatpush2.msra.mxu0 0.0
    %348 = vmatprep.subr.mxu0 0.0
    %349 = vmatpush2.msra.mxu0 0.0
    %350 = vmatprep.subr.mxu0 0.0
    %351 = vmatpush2.msra.mxu0 0.0
    %352 = vmatprep.subr.mxu0 0.0
    %353 = vmatpush2.msra.mxu0 0.0
    %354 = vmatprep.subr.mxu0 0.0
    %355 = vmatpush2.msra.mxu0 0.0
    %356 = vmatprep.subr.mxu0 0.0
    %357 = vmatpush2.msra.mxu0 0.0
    %358 = vmatprep.subr.mxu0 0.0
    %359 = vmatpush2.msra.mxu0 0.0
    %360 = vmatprep.subr.mxu0 0.0
    %361 = vmatpush2.msra.mxu0 0.0
    %362 = vmatprep.mubr.f32.mxu0 0.0
    %363 = vmatmul.mubr.f32.gmra.mxu0 %v296
    %v364 = vpop.f32.mrf.mxu0
    %v365 = vadd.f32 0.0, %v364
    %v366 = vpop.f32.mrf.mxu0
    %367 = vdwg.mxu0
    %v368 = vadd.f32 %v287, %v365
    %v369 = vld [vmem:[%s2] sm:$0xf]
    %371 = vset.pattern.permute.xlu0 0
    %372 = vperm.xlu0 %371, %v369
    %v373 = vpop.permute.xlu0 %372
    %v375 = vadd.f32 %v368, %v373
    %v376 = vmax.f32 %v375, 0.0
    %v377 = vld [vmem:[%s7] sm:$0xff]
    %v378 = vld [vmem:[%s7 + $0x8] sm:$0xff]
    %s379 = scalar_lea.vmem %s1, 16
    %v380 = vld [vmem:[%s379] sm:$0xff]
    %v381 = vld [vmem:[%s379 + $0x8] sm:$0xf]
    %v383 = vsel %vm48, %v380, 0
    %v386 = vsel %vm48, %v381, 0
    %v389 = vsel %vm55, %v376, 0
    %391 = vmatprep.subr.mxu0 0.0
    %392 = vmatpush1.msra.mxu0 0.0
    %393 = vmatprep.subr.mxu0 0.0
    %394 = vmatpush1.msra.mxu0 0.0
    %395 = vmatprep.subr.mxu0 0.0
    %396 = vmatpush1.msra.mxu0 0.0
    %397 = vmatprep.subr.mxu0 0.0
    %398 = vmatpush1.msra.mxu0 0.0
    %399 = vmatprep.subr.mxu0 0.0
    %400 = vmatpush1.msra.mxu0 0.0
    %401 = vmatprep.subr.mxu0 0.0
    %402 = vmatpush1.msra.mxu0 0.0
    %403 = vmatprep.subr.mxu0 0.0
    %404 = vmatpush1.msra.mxu0 0.0
    %405 = vmatprep.subr.mxu0 0.0
    %406 = vmatpush1.msra.mxu0 0.0
    %407 = vmatprep.subr.mxu0 0.0
    %408 = vmatpush1.msra.mxu0 0.0
    %409 = vmatprep.subr.mxu0 0.0
    %410 = vmatpush1.msra.mxu0 0.0
    %411 = vmatprep.subr.mxu0 0.0
    %412 = vmatpush1.msra.mxu0 0.0
    %413 = vmatprep.subr.mxu0 0.0
    %414 = vmatpush1.msra.mxu0 0.0
    %415 = vmatprep.subr.mxu0 0.0
    %416 = vmatpush1.msra.mxu0 0.0
    %417 = vmatprep.subr.mxu0 0.0
    %418 = vmatpush1.msra.mxu0 0.0
    %419 = vmatprep.subr.mxu0 0.0
    %420 = vmatpush1.msra.mxu0 0.0
    %421 = vmatprep.subr.mxu0 0.0
    %422 = vmatpush1.msra.mxu0 %v389
    %423 = vmatprep.subr.mxu0 0.0
    %424 = vmatpush2.msra.mxu0 0.0
    %425 = vmatprep.subr.mxu0 0.0
    %426 = vmatpush2.msra.mxu0 0.0
    %427 = vmatprep.subr.mxu0 0.0
    %428 = vmatpush2.msra.mxu0 0.0
    %429 = vmatprep.subr.mxu0 0.0
    %430 = vmatpush2.msra.mxu0 0.0
    %431 = vmatprep.subr.mxu0 0.0
    %432 = vmatpush2.msra.mxu0 0.0
    %433 = vmatprep.subr.mxu0 0.0
    %434 = vmatpush2.msra.mxu0 0.0
    %435 = vmatprep.subr.mxu0 0.0
    %436 = vmatpush2.msra.mxu0 0.0
    %437 = vmatprep.subr.mxu0 0.0
    %438 = vmatpush2.msra.mxu0 0.0
    %439 = vmatprep.subr.mxu0 0.0
    %440 = vmatpush2.msra.mxu0 0.0
    %441 = vmatprep.subr.mxu0 0.0
    %442 = vmatpush2.msra.mxu0 0.0
    %443 = vmatprep.subr.mxu0 0.0
    %444 = vmatpush2.msra.mxu0 0.0
    %445 = vmatprep.subr.mxu0 0.0
    %446 = vmatpush2.msra.mxu0 0.0
    %447 = vmatprep.subr.mxu0 0.0
    %448 = vmatpush2.msra.mxu0 0.0
    %449 = vmatprep.subr.mxu0 0.0
    %450 = vmatpush2.msra.mxu0 0.0
    %451 = vmatprep.subr.mxu0 0.0
    %452 = vmatpush2.msra.mxu0 0.0
    %453 = vmatprep.subr.mxu0 0.0
    %454 = vmatpush2.msra.mxu0 0.0
    %455 = vmatprep.mubr.f32.mxu0 0.0
    %456 = vmatmul.mubr.f32.gmra.mxu0 %v383
    %v457 = vpop.f32.mrf.mxu0
    %v458 = vadd.f32 0.0, %v457
    %v459 = vpop.f32.mrf.mxu0
    %460 = vmatprep.mubr.f32.mxu0 0.0
    %461 = vmatmul.mubr.f32.gmra.mxu0 %v386
    %v462 = vpop.f32.mrf.mxu0
    %v463 = vadd.f32 0.0, %v462
    %v464 = vpop.f32.mrf.mxu0
    %465 = vdwg.mxu0
    %v466 = vld [vmem:[%s4] sm:$0xff]
    %v467 = vld [vmem:[%s4 + $0x8] sm:$0xff]
    %s468 = scalar_lea.vmem %s4, 16
    %v469 = vld [vmem:[%s468] sm:$0xff]
    %v470 = vld [vmem:[%s468 + $0x8] sm:$0xff]
    %v472 = vrot.slane %v458, 4
    %vm473 = vcmask 130048
    %v474 = vsel %vm473, %v472, 0
    %476 = vmatprep.subr.mxu0 0.0
    %477 = vmatpush1.msra.mxu0 0.0
    %478 = vmatprep.subr.mxu0 0.0
    %479 = vmatpush1.msra.mxu0 0.0
    %480 = vmatprep.subr.mxu0 0.0
    %481 = vmatpush1.msra.mxu0 0.0
    %482 = vmatprep.subr.mxu0 0.0
    %483 = vmatpush1.msra.mxu0 0.0
    %484 = vmatprep.subr.mxu0 0.0
    %485 = vmatpush1.msra.mxu0 0.0
    %486 = vmatprep.subr.mxu0 0.0
    %487 = vmatpush1.msra.mxu0 0.0
    %488 = vmatprep.subr.mxu0 0.0
    %489 = vmatpush1.msra.mxu0 0.0
    %490 = vmatprep.subr.mxu0 0.0
    %491 = vmatpush1.msra.mxu0 0.0
    %492 = vmatprep.subr.mxu0 0.0
    %493 = vmatpush1.msra.mxu0 0.0
    %494 = vmatprep.subr.mxu0 0.0
    %495 = vmatpush1.msra.mxu0 0.0
    %496 = vmatprep.subr.mxu0 0.0
    %497 = vmatpush1.msra.mxu0 0.0
    %498 = vmatprep.subr.mxu0 0.0
    %499 = vmatpush1.msra.mxu0 0.0
    %500 = vmatprep.subr.mxu0 0.0
    %501 = vmatpush1.msra.mxu0 0.0
    %502 = vmatprep.subr.mxu0 0.0
    %503 = vmatpush1.msra.mxu0 0.0
    %504 = vmatprep.subr.mxu0 0.0
    %505 = vmatpush1.msra.mxu0 %v470
    %506 = vmatprep.subr.mxu0 0.0
    %507 = vmatpush1.msra.mxu0 %v469
    %508 = vmatprep.subr.mxu0 0.0
    %509 = vmatpush2.msra.mxu0 0.0
    %510 = vmatprep.subr.mxu0 0.0
    %511 = vmatpush2.msra.mxu0 0.0
    %512 = vmatprep.subr.mxu0 0.0
    %513 = vmatpush2.msra.mxu0 0.0
    %514 = vmatprep.subr.mxu0 0.0
    %515 = vmatpush2.msra.mxu0 0.0
    %516 = vmatprep.subr.mxu0 0.0
    %517 = vmatpush2.msra.mxu0 0.0
    %518 = vmatprep.subr.mxu0 0.0
    %519 = vmatpush2.msra.mxu0 0.0
    %520 = vmatprep.subr.mxu0 0.0
    %521 = vmatpush2.msra.mxu0 0.0
    %522 = vmatprep.subr.mxu0 0.0
    %523 = vmatpush2.msra.mxu0 0.0
    %524 = vmatprep.subr.mxu0 0.0
    %525 = vmatpush2.msra.mxu0 0.0
    %526 = vmatprep.subr.mxu0 0.0
    %527 = vmatpush2.msra.mxu0 0.0
    %528 = vmatprep.subr.mxu0 0.0
    %529 = vmatpush2.msra.mxu0 0.0
    %530 = vmatprep.subr.mxu0 0.0
    %531 = vmatpush2.msra.mxu0 0.0
    %532 = vmatprep.subr.mxu0 0.0
    %533 = vmatpush2.msra.mxu0 0.0
    %534 = vmatprep.subr.mxu0 0.0
    %535 = vmatpush2.msra.mxu0 0.0
    %536 = vmatprep.subr.mxu0 0.0
    %537 = vmatpush2.msra.mxu0 0.0
    %538 = vmatprep.subr.mxu0 0.0
    %539 = vmatpush2.msra.mxu0 0.0
    %540 = vmatprep.mubr.f32.mxu0 0.0
    %541 = vmatmul.mubr.f32.gmra.mxu0 %v474
    %v542 = vpop.f32.mrf.mxu0
    %v543 = vadd.f32 0.0, %v542
    %v544 = vpop.f32.mrf.mxu0
    %545 = vdwg.mxu0
    %v546 = vsel %vm473, %v458, 0
    %548 = vmatprep.subr.mxu0 0.0
    %549 = vmatpush1.msra.mxu0 0.0
    %550 = vmatprep.subr.mxu0 0.0
    %551 = vmatpush1.msra.mxu0 0.0
    %552 = vmatprep.subr.mxu0 0.0
    %553 = vmatpush1.msra.mxu0 0.0
    %554 = vmatprep.subr.mxu0 0.0
    %555 = vmatpush1.msra.mxu0 0.0
    %556 = vmatprep.subr.mxu0 0.0
    %557 = vmatpush1.msra.mxu0 0.0
    %558 = vmatprep.subr.mxu0 0.0
    %559 = vmatpush1.msra.mxu0 0.0
    %560 = vmatprep.subr.mxu0 0.0
    %561 = vmatpush1.msra.mxu0 0.0
    %562 = vmatprep.subr.mxu0 0.0
    %563 = vmatpush1.msra.mxu0 0.0
    %564 = vmatprep.subr.mxu0 0.0
    %565 = vmatpush1.msra.mxu0 0.0
    %566 = vmatprep.subr.mxu0 0.0
    %567 = vmatpush1.msra.mxu0 0.0
    %568 = vmatprep.subr.mxu0 0.0
    %569 = vmatpush1.msra.mxu0 0.0
    %570 = vmatprep.subr.mxu0 0.0
    %571 = vmatpush1.msra.mxu0 0.0
    %572 = vmatprep.subr.mxu0 0.0
    %573 = vmatpush1.msra.mxu0 0.0
    %574 = vmatprep.subr.mxu0 0.0
    %575 = vmatpush1.msra.mxu0 0.0
    %576 = vmatprep.subr.mxu0 0.0
    %577 = vmatpush1.msra.mxu0 %v467
    %578 = vmatprep.subr.mxu0 0.0
    %579 = vmatpush1.msra.mxu0 %v466
    %580 = vmatprep.subr.mxu0 0.0
    %581 = vmatpush2.msra.mxu0 0.0
    %582 = vmatprep.subr.mxu0 0.0
    %583 = vmatpush2.msra.mxu0 0.0
    %584 = vmatprep.subr.mxu0 0.0
    %585 = vmatpush2.msra.mxu0 0.0
    %586 = vmatprep.subr.mxu0 0.0
    %587 = vmatpush2.msra.mxu0 0.0
    %588 = vmatprep.subr.mxu0 0.0
    %589 = vmatpush2.msra.mxu0 0.0
    %590 = vmatprep.subr.mxu0 0.0
    %591 = vmatpush2.msra.mxu0 0.0
    %592 = vmatprep.subr.mxu0 0.0
    %593 = vmatpush2.msra.mxu0 0.0
    %594 = vmatprep.subr.mxu0 0.0
    %595 = vmatpush2.msra.mxu0 0.0
    %596 = vmatprep.subr.mxu0 0.0
    %597 = vmatpush2.msra.mxu0 0.0
    %598 = vmatprep.subr.mxu0 0.0
    %599 = vmatpush2.msra.mxu0 0.0
    %600 = vmatprep.subr.mxu0 0.0
    %601 = vmatpush2.msra.mxu0 0.0
    %602 = vmatprep.subr.mxu0 0.0
    %603 = vmatpush2.msra.mxu0 0.0
    %604 = vmatprep.subr.mxu0 0.0
    %605 = vmatpush2.msra.mxu0 0.0
    %606 = vmatprep.subr.mxu0 0.0
    %607 = vmatpush2.msra.mxu0 0.0
    %608 = vmatprep.subr.mxu0 0.0
    %609 = vmatpush2.msra.mxu0 0.0
    %610 = vmatprep.subr.mxu0 0.0
    %611 = vmatpush2.msra.mxu0 0.0
    %612 = vmatprep.mubr.f32.mxu0 0.0
    %613 = vmatmul.mubr.f32.gmra.mxu0 %v546
    %v614 = vpop.f32.mrf.mxu0
    %v615 = vadd.f32 %v543, %v614
    %v616 = vpop.f32.mrf.mxu0
    %617 = vdwg.mxu0
    %s618 = scalar_lea.vmem %s4, 32
    %v619 = vld [vmem:[%s618] sm:$0xff]
    %v620 = vld [vmem:[%s618 + $0x8] sm:$0xff]
    %v622 = vsel %vm473, %v463, 0
    %624 = vmatprep.subr.mxu0 0.0
    %625 = vmatpush1.msra.mxu0 0.0
    %626 = vmatprep.subr.mxu0 0.0
    %627 = vmatpush1.msra.mxu0 0.0
    %628 = vmatprep.subr.mxu0 0.0
    %629 = vmatpush1.msra.mxu0 0.0
    %630 = vmatprep.subr.mxu0 0.0
    %631 = vmatpush1.msra.mxu0 0.0
    %632 = vmatprep.subr.mxu0 0.0
    %633 = vmatpush1.msra.mxu0 0.0
    %634 = vmatprep.subr.mxu0 0.0
    %635 = vmatpush1.msra.mxu0 0.0
    %636 = vmatprep.subr.mxu0 0.0
    %637 = vmatpush1.msra.mxu0 0.0
    %638 = vmatprep.subr.mxu0 0.0
    %639 = vmatpush1.msra.mxu0 0.0
    %640 = vmatprep.subr.mxu0 0.0
    %641 = vmatpush1.msra.mxu0 0.0
    %642 = vmatprep.subr.mxu0 0.0
    %643 = vmatpush1.msra.mxu0 0.0
    %644 = vmatprep.subr.mxu0 0.0
    %645 = vmatpush1.msra.mxu0 0.0
    %646 = vmatprep.subr.mxu0 0.0
    %647 = vmatpush1.msra.mxu0 0.0
    %648 = vmatprep.subr.mxu0 0.0
    %649 = vmatpush1.msra.mxu0 0.0
    %650 = vmatprep.subr.mxu0 0.0
    %651 = vmatpush1.msra.mxu0 0.0
    %652 = vmatprep.subr.mxu0 0.0
    %653 = vmatpush1.msra.mxu0 %v620
    %654 = vmatprep.subr.mxu0 0.0
    %655 = vmatpush1.msra.mxu0 %v619
    %656 = vmatprep.subr.mxu0 0.0
    %657 = vmatpush2.msra.mxu0 0.0
    %658 = vmatprep.subr.mxu0 0.0
    %659 = vmatpush2.msra.mxu0 0.0
    %660 = vmatprep.subr.mxu0 0.0
    %661 = vmatpush2.msra.mxu0 0.0
    %662 = vmatprep.subr.mxu0 0.0
    %663 = vmatpush2.msra.mxu0 0.0
    %664 = vmatprep.subr.mxu0 0.0
    %665 = vmatpush2.msra.mxu0 0.0
    %666 = vmatprep.subr.mxu0 0.0
    %667 = vmatpush2.msra.mxu0 0.0
    %668 = vmatprep.subr.mxu0 0.0
    %669 = vmatpush2.msra.mxu0 0.0
    %670 = vmatprep.subr.mxu0 0.0
    %671 = vmatpush2.msra.mxu0 0.0
    %672 = vmatprep.subr.mxu0 0.0
    %673 = vmatpush2.msra.mxu0 0.0
    %674 = vmatprep.subr.mxu0 0.0
    %675 = vmatpush2.msra.mxu0 0.0
    %676 = vmatprep.subr.mxu0 0.0
    %677 = vmatpush2.msra.mxu0 0.0
    %678 = vmatprep.subr.mxu0 0.0
    %679 = vmatpush2.msra.mxu0 0.0
    %680 = vmatprep.subr.mxu0 0.0
    %681 = vmatpush2.msra.mxu0 0.0
    %682 = vmatprep.subr.mxu0 0.0
    %683 = vmatpush2.msra.mxu0 0.0
    %684 = vmatprep.subr.mxu0 0.0
    %685 = vmatpush2.msra.mxu0 0.0
    %686 = vmatprep.subr.mxu0 0.0
    %687 = vmatpush2.msra.mxu0 0.0
    %688 = vmatprep.mubr.f32.mxu0 0.0
    %689 = vmatmul.mubr.f32.gmra.mxu0 %v622
    %v690 = vpop.f32.mrf.mxu0
    %v691 = vadd.f32 0.0, %v690
    %v692 = vpop.f32.mrf.mxu0
    %693 = vdwg.mxu0
    %v694 = vadd.f32 %v615, %v691
    %s695 = scalar_lea.vmem %s2, 4
    %v696 = vld [vmem:[%s695] sm:$0xf]
    %698 = vset.pattern.permute.xlu0 0
    %699 = vperm.xlu0 %698, %v696
    %v700 = vpop.permute.xlu0 %699
    %v702 = vadd.f32 %v694, %v700
    %v703 = vmax.f32 %v702, 0.0
    %v704 = vld [vmem:[%s8] sm:$0xff]
    %vm705 = vcmask 64512
    %v707 = vsel %vm705, %v703, 0
    %709 = vmatprep.subr.mxu0 0.0
    %710 = vmatpush1.msra.mxu0 0.0
    %711 = vmatprep.subr.mxu0 0.0
    %712 = vmatpush1.msra.mxu0 0.0
    %713 = vmatprep.subr.mxu0 0.0
    %714 = vmatpush1.msra.mxu0 0.0
    %715 = vmatprep.subr.mxu0 0.0
    %716 = vmatpush1.msra.mxu0 0.0
    %717 = vmatprep.subr.mxu0 0.0
    %718 = vmatpush1.msra.mxu0 0.0
    %719 = vmatprep.subr.mxu0 0.0
    %720 = vmatpush1.msra.mxu0 0.0
    %721 = vmatprep.subr.mxu0 0.0
    %722 = vmatpush1.msra.mxu0 0.0
    %723 = vmatprep.subr.mxu0 0.0
    %724 = vmatpush1.msra.mxu0 0.0
    %725 = vmatprep.subr.mxu0 0.0
    %726 = vmatpush1.msra.mxu0 0.0
    %727 = vmatprep.subr.mxu0 0.0
    %728 = vmatpush1.msra.mxu0 0.0
    %729 = vmatprep.subr.mxu0 0.0
    %730 = vmatpush1.msra.mxu0 0.0
    %731 = vmatprep.subr.mxu0 0.0
    %732 = vmatpush1.msra.mxu0 0.0
    %733 = vmatprep.subr.mxu0 0.0
    %734 = vmatpush1.msra.mxu0 0.0
    %735 = vmatprep.subr.mxu0 0.0
    %736 = vmatpush1.msra.mxu0 0.0
    %737 = vmatprep.subr.mxu0 0.0
    %738 = vmatpush1.msra.mxu0 0.0
    %739 = vmatprep.subr.mxu0 0.0
    %740 = vmatpush1.msra.mxu0 %v704
    %741 = vmatprep.subr.mxu0 0.0
    %742 = vmatpush2.msra.mxu0 0.0
    %743 = vmatprep.subr.mxu0 0.0
    %744 = vmatpush2.msra.mxu0 0.0
    %745 = vmatprep.subr.mxu0 0.0
    %746 = vmatpush2.msra.mxu0 0.0
    %747 = vmatprep.subr.mxu0 0.0
    %748 = vmatpush2.msra.mxu0 0.0
    %749 = vmatprep.subr.mxu0 0.0
    %750 = vmatpush2.msra.mxu0 0.0
    %751 = vmatprep.subr.mxu0 0.0
    %752 = vmatpush2.msra.mxu0 0.0
    %753 = vmatprep.subr.mxu0 0.0
    %754 = vmatpush2.msra.mxu0 0.0
    %755 = vmatprep.subr.mxu0 0.0
    %756 = vmatpush2.msra.mxu0 0.0
    %757 = vmatprep.subr.mxu0 0.0
    %758 = vmatpush2.msra.mxu0 0.0
    %759 = vmatprep.subr.mxu0 0.0
    %760 = vmatpush2.msra.mxu0 0.0
    %761 = vmatprep.subr.mxu0 0.0
    %762 = vmatpush2.msra.mxu0 0.0
    %763 = vmatprep.subr.mxu0 0.0
    %764 = vmatpush2.msra.mxu0 0.0
    %765 = vmatprep.subr.mxu0 0.0
    %766 = vmatpush2.msra.mxu0 0.0
    %767 = vmatprep.subr.mxu0 0.0
    %768 = vmatpush2.msra.mxu0 0.0
    %769 = vmatprep.subr.mxu0 0.0
    %770 = vmatpush2.msra.mxu0 0.0
    %771 = vmatprep.subr.mxu0 0.0
    %772 = vmatpush2.msra.mxu0 0.0
    %773 = vmatprep.mubr.f32.mxu0 0.0
    %774 = vmatmul.mubr.f32.gmra.mxu0 %v707
    %v775 = vpop.f32.mrf.mxu0
    %v776 = vadd.f32 0.0, %v775
    %v777 = vpop.f32.mrf.mxu0
    %778 = vdwg.mxu0
    %v779 = vsel %vm473, %v376, 0
    %781 = vmatprep.subr.mxu0 0.0
    %782 = vmatpush1.msra.mxu0 0.0
    %783 = vmatprep.subr.mxu0 0.0
    %784 = vmatpush1.msra.mxu0 0.0
    %785 = vmatprep.subr.mxu0 0.0
    %786 = vmatpush1.msra.mxu0 0.0
    %787 = vmatprep.subr.mxu0 0.0
    %788 = vmatpush1.msra.mxu0 0.0
    %789 = vmatprep.subr.mxu0 0.0
    %790 = vmatpush1.msra.mxu0 0.0
    %791 = vmatprep.subr.mxu0 0.0
    %792 = vmatpush1.msra.mxu0 0.0
    %793 = vmatprep.subr.mxu0 0.0
    %794 = vmatpush1.msra.mxu0 0.0
    %795 = vmatprep.subr.mxu0 0.0
    %796 = vmatpush1.msra.mxu0 0.0
    %797 = vmatprep.subr.mxu0 0.0
    %798 = vmatpush1.msra.mxu0 0.0
    %799 = vmatprep.subr.mxu0 0.0
    %800 = vmatpush1.msra.mxu0 0.0
    %801 = vmatprep.subr.mxu0 0.0
    %802 = vmatpush1.msra.mxu0 0.0
    %803 = vmatprep.subr.mxu0 0.0
    %804 = vmatpush1.msra.mxu0 0.0
    %805 = vmatprep.subr.mxu0 0.0
    %806 = vmatpush1.msra.mxu0 0.0
    %807 = vmatprep.subr.mxu0 0.0
    %808 = vmatpush1.msra.mxu0 0.0
    %809 = vmatprep.subr.mxu0 0.0
    %810 = vmatpush1.msra.mxu0 %v378
    %811 = vmatprep.subr.mxu0 0.0
    %812 = vmatpush1.msra.mxu0 %v377
    %813 = vmatprep.subr.mxu0 0.0
    %814 = vmatpush2.msra.mxu0 0.0
    %815 = vmatprep.subr.mxu0 0.0
    %816 = vmatpush2.msra.mxu0 0.0
    %817 = vmatprep.subr.mxu0 0.0
    %818 = vmatpush2.msra.mxu0 0.0
    %819 = vmatprep.subr.mxu0 0.0
    %820 = vmatpush2.msra.mxu0 0.0
    %821 = vmatprep.subr.mxu0 0.0
    %822 = vmatpush2.msra.mxu0 0.0
    %823 = vmatprep.subr.mxu0 0.0
    %824 = vmatpush2.msra.mxu0 0.0
    %825 = vmatprep.subr.mxu0 0.0
    %826 = vmatpush2.msra.mxu0 0.0
    %827 = vmatprep.subr.mxu0 0.0
    %828 = vmatpush2.msra.mxu0 0.0
    %829 = vmatprep.subr.mxu0 0.0
    %830 = vmatpush2.msra.mxu0 0.0
    %831 = vmatprep.subr.mxu0 0.0
    %832 = vmatpush2.msra.mxu0 0.0
    %833 = vmatprep.subr.mxu0 0.0
    %834 = vmatpush2.msra.mxu0 0.0
    %835 = vmatprep.subr.mxu0 0.0
    %836 = vmatpush2.msra.mxu0 0.0
    %837 = vmatprep.subr.mxu0 0.0
    %838 = vmatpush2.msra.mxu0 0.0
    %839 = vmatprep.subr.mxu0 0.0
    %840 = vmatpush2.msra.mxu0 0.0
    %841 = vmatprep.subr.mxu0 0.0
    %842 = vmatpush2.msra.mxu0 0.0
    %843 = vmatprep.subr.mxu0 0.0
    %844 = vmatpush2.msra.mxu0 0.0
    %845 = vmatprep.mubr.f32.mxu0 0.0
    %846 = vmatmul.mubr.f32.gmra.mxu0 %v779
    %v847 = vpop.f32.mrf.mxu0
    %v848 = vadd.f32 %v776, %v847
    %v849 = vpop.f32.mrf.mxu0
    %850 = vdwg.mxu0
    %s851 = scalar_lea.vmem %s1, 32
    %v852 = vld [vmem:[%s851] sm:$0xff]
    %v853 = vld [vmem:[%s851 + $0x8] sm:$0xf]
    %v855 = vsel %vm48, %v852, 0
    %v858 = vsel %vm48, %v853, 0
    %v860 = vsel %vm55, %v703, 0
    %862 = vmatprep.subr.mxu0 0.0
    %863 = vmatpush1.msra.mxu0 0.0
    %864 = vmatprep.subr.mxu0 0.0
    %865 = vmatpush1.msra.mxu0 0.0
    %866 = vmatprep.subr.mxu0 0.0
    %867 = vmatpush1.msra.mxu0 0.0
    %868 = vmatprep.subr.mxu0 0.0
    %869 = vmatpush1.msra.mxu0 0.0
    %870 = vmatprep.subr.mxu0 0.0
    %871 = vmatpush1.msra.mxu0 0.0
    %872 = vmatprep.subr.mxu0 0.0
    %873 = vmatpush1.msra.mxu0 0.0
    %874 = vmatprep.subr.mxu0 0.0
    %875 = vmatpush1.msra.mxu0 0.0
    %876 = vmatprep.subr.mxu0 0.0
    %877 = vmatpush1.msra.mxu0 0.0
    %878 = vmatprep.subr.mxu0 0.0
    %879 = vmatpush1.msra.mxu0 0.0
    %880 = vmatprep.subr.mxu0 0.0
    %881 = vmatpush1.msra.mxu0 0.0
    %882 = vmatprep.subr.mxu0 0.0
    %883 = vmatpush1.msra.mxu0 0.0
    %884 = vmatprep.subr.mxu0 0.0
    %885 = vmatpush1.msra.mxu0 0.0
    %886 = vmatprep.subr.mxu0 0.0
    %887 = vmatpush1.msra.mxu0 0.0
    %888 = vmatprep.subr.mxu0 0.0
    %889 = vmatpush1.msra.mxu0 0.0
    %890 = vmatprep.subr.mxu0 0.0
    %891 = vmatpush1.msra.mxu0 0.0
    %892 = vmatprep.subr.mxu0 0.0
    %893 = vmatpush1.msra.mxu0 %v860
    %894 = vmatprep.subr.mxu0 0.0
    %895 = vmatpush2.msra.mxu0 0.0
    %896 = vmatprep.subr.mxu0 0.0
    %897 = vmatpush2.msra.mxu0 0.0
    %898 = vmatprep.subr.mxu0 0.0
    %899 = vmatpush2.msra.mxu0 0.0
    %900 = vmatprep.subr.mxu0 0.0
    %901 = vmatpush2.msra.mxu0 0.0
    %902 = vmatprep.subr.mxu0 0.0
    %903 = vmatpush2.msra.mxu0 0.0
    %904 = vmatprep.subr.mxu0 0.0
    %905 = vmatpush2.msra.mxu0 0.0
    %906 = vmatprep.subr.mxu0 0.0
    %907 = vmatpush2.msra.mxu0 0.0
    %908 = vmatprep.subr.mxu0 0.0
    %909 = vmatpush2.msra.mxu0 0.0
    %910 = vmatprep.subr.mxu0 0.0
    %911 = vmatpush2.msra.mxu0 0.0
    %912 = vmatprep.subr.mxu0 0.0
    %913 = vmatpush2.msra.mxu0 0.0
    %914 = vmatprep.subr.mxu0 0.0
    %915 = vmatpush2.msra.mxu0 0.0
    %916 = vmatprep.subr.mxu0 0.0
    %917 = vmatpush2.msra.mxu0 0.0
    %918 = vmatprep.subr.mxu0 0.0
    %919 = vmatpush2.msra.mxu0 0.0
    %920 = vmatprep.subr.mxu0 0.0
    %921 = vmatpush2.msra.mxu0 0.0
    %922 = vmatprep.subr.mxu0 0.0
    %923 = vmatpush2.msra.mxu0 0.0
    %924 = vmatprep.subr.mxu0 0.0
    %925 = vmatpush2.msra.mxu0 0.0
    %926 = vmatprep.mubr.f32.mxu0 0.0
    %927 = vmatmul.mubr.f32.gmra.mxu0 %v855
    %v928 = vpop.f32.mrf.mxu0
    %v929 = vadd.f32 0.0, %v928
    %v930 = vpop.f32.mrf.mxu0
    %931 = vmatprep.mubr.f32.mxu0 0.0
    %932 = vmatmul.mubr.f32.gmra.mxu0 %v858
    %v933 = vpop.f32.mrf.mxu0
    %v934 = vadd.f32 0.0, %v933
    %v935 = vpop.f32.mrf.mxu0
    %936 = vdwg.mxu0
    %v937 = vld [vmem:[%s5] sm:$0xff]
    %s938 = scalar_lea.vmem %s5, 8
    %v939 = vld [vmem:[%s938] sm:$0xff]
    %v941 = vrot.slane %v929, 4
    %v942 = vsel %vm705, %v941, 0
    %944 = vmatprep.subr.mxu0 0.0
    %945 = vmatpush1.msra.mxu0 0.0
    %946 = vmatprep.subr.mxu0 0.0
    %947 = vmatpush1.msra.mxu0 0.0
    %948 = vmatprep.subr.mxu0 0.0
    %949 = vmatpush1.msra.mxu0 0.0
    %950 = vmatprep.subr.mxu0 0.0
    %951 = vmatpush1.msra.mxu0 0.0
    %952 = vmatprep.subr.mxu0 0.0
    %953 = vmatpush1.msra.mxu0 0.0
    %954 = vmatprep.subr.mxu0 0.0
    %955 = vmatpush1.msra.mxu0 0.0
    %956 = vmatprep.subr.mxu0 0.0
    %957 = vmatpush1.msra.mxu0 0.0
    %958 = vmatprep.subr.mxu0 0.0
    %959 = vmatpush1.msra.mxu0 0.0
    %960 = vmatprep.subr.mxu0 0.0
    %961 = vmatpush1.msra.mxu0 0.0
    %962 = vmatprep.subr.mxu0 0.0
    %963 = vmatpush1.msra.mxu0 0.0
    %964 = vmatprep.subr.mxu0 0.0
    %965 = vmatpush1.msra.mxu0 0.0
    %966 = vmatprep.subr.mxu0 0.0
    %967 = vmatpush1.msra.mxu0 0.0
    %968 = vmatprep.subr.mxu0 0.0
    %969 = vmatpush1.msra.mxu0 0.0
    %970 = vmatprep.subr.mxu0 0.0
    %971 = vmatpush1.msra.mxu0 0.0
    %972 = vmatprep.subr.mxu0 0.0
    %973 = vmatpush1.msra.mxu0 0.0
    %974 = vmatprep.subr.mxu0 0.0
    %975 = vmatpush1.msra.mxu0 %v939
    %976 = vmatprep.subr.mxu0 0.0
    %977 = vmatpush2.msra.mxu0 0.0
    %978 = vmatprep.subr.mxu0 0.0
    %979 = vmatpush2.msra.mxu0 0.0
    %980 = vmatprep.subr.mxu0 0.0
    %981 = vmatpush2.msra.mxu0 0.0
    %982 = vmatprep.subr.mxu0 0.0
    %983 = vmatpush2.msra.mxu0 0.0
    %984 = vmatprep.subr.mxu0 0.0
    %985 = vmatpush2.msra.mxu0 0.0
    %986 = vmatprep.subr.mxu0 0.0
    %987 = vmatpush2.msra.mxu0 0.0
    %988 = vmatprep.subr.mxu0 0.0
    %989 = vmatpush2.msra.mxu0 0.0
    %990 = vmatprep.subr.mxu0 0.0
    %991 = vmatpush2.msra.mxu0 0.0
    %992 = vmatprep.subr.mxu0 0.0
    %993 = vmatpush2.msra.mxu0 0.0
    %994 = vmatprep.subr.mxu0 0.0
    %995 = vmatpush2.msra.mxu0 0.0
    %996 = vmatprep.subr.mxu0 0.0
    %997 = vmatpush2.msra.mxu0 0.0
    %998 = vmatprep.subr.mxu0 0.0
    %999 = vmatpush2.msra.mxu0 0.0
    %1000 = vmatprep.subr.mxu0 0.0
    %1001 = vmatpush2.msra.mxu0 0.0
    %1002 = vmatprep.subr.mxu0 0.0
    %1003 = vmatpush2.msra.mxu0 0.0
    %1004 = vmatprep.subr.mxu0 0.0
    %1005 = vmatpush2.msra.mxu0 0.0
    %1006 = vmatprep.subr.mxu0 0.0
    %1007 = vmatpush2.msra.mxu0 0.0
    %1008 = vmatprep.mubr.f32.mxu0 0.0
    %1009 = vmatmul.mubr.f32.gmra.mxu0 %v942
    %v1010 = vpop.f32.mrf.mxu0
    %v1011 = vadd.f32 0.0, %v1010
    %v1012 = vpop.f32.mrf.mxu0
    %1013 = vdwg.mxu0
    %v1014 = vsel %vm705, %v929, 0
    %1016 = vmatprep.subr.mxu0 0.0
    %1017 = vmatpush1.msra.mxu0 0.0
    %1018 = vmatprep.subr.mxu0 0.0
    %1019 = vmatpush1.msra.mxu0 0.0
    %1020 = vmatprep.subr.mxu0 0.0
    %1021 = vmatpush1.msra.mxu0 0.0
    %1022 = vmatprep.subr.mxu0 0.0
    %1023 = vmatpush1.msra.mxu0 0.0
    %1024 = vmatprep.subr.mxu0 0.0
    %1025 = vmatpush1.msra.mxu0 0.0
    %1026 = vmatprep.subr.mxu0 0.0
    %1027 = vmatpush1.msra.mxu0 0.0
    %1028 = vmatprep.subr.mxu0 0.0
    %1029 = vmatpush1.msra.mxu0 0.0
    %1030 = vmatprep.subr.mxu0 0.0
    %1031 = vmatpush1.msra.mxu0 0.0
    %1032 = vmatprep.subr.mxu0 0.0
    %1033 = vmatpush1.msra.mxu0 0.0
    %1034 = vmatprep.subr.mxu0 0.0
    %1035 = vmatpush1.msra.mxu0 0.0
    %1036 = vmatprep.subr.mxu0 0.0
    %1037 = vmatpush1.msra.mxu0 0.0
    %1038 = vmatprep.subr.mxu0 0.0
    %1039 = vmatpush1.msra.mxu0 0.0
    %1040 = vmatprep.subr.mxu0 0.0
    %1041 = vmatpush1.msra.mxu0 0.0
    %1042 = vmatprep.subr.mxu0 0.0
    %1043 = vmatpush1.msra.mxu0 0.0
    %1044 = vmatprep.subr.mxu0 0.0
    %1045 = vmatpush1.msra.mxu0 0.0
    %1046 = vmatprep.subr.mxu0 0.0
    %1047 = vmatpush1.msra.mxu0 %v937
    %1048 = vmatprep.subr.mxu0 0.0
    %1049 = vmatpush2.msra.mxu0 0.0
    %1050 = vmatprep.subr.mxu0 0.0
    %1051 = vmatpush2.msra.mxu0 0.0
    %1052 = vmatprep.subr.mxu0 0.0
    %1053 = vmatpush2.msra.mxu0 0.0
    %1054 = vmatprep.subr.mxu0 0.0
    %1055 = vmatpush2.msra.mxu0 0.0
    %1056 = vmatprep.subr.mxu0 0.0
    %1057 = vmatpush2.msra.mxu0 0.0
    %1058 = vmatprep.subr.mxu0 0.0
    %1059 = vmatpush2.msra.mxu0 0.0
    %1060 = vmatprep.subr.mxu0 0.0
    %1061 = vmatpush2.msra.mxu0 0.0
    %1062 = vmatprep.subr.mxu0 0.0
    %1063 = vmatpush2.msra.mxu0 0.0
    %1064 = vmatprep.subr.mxu0 0.0
    %1065 = vmatpush2.msra.mxu0 0.0
    %1066 = vmatprep.subr.mxu0 0.0
    %1067 = vmatpush2.msra.mxu0 0.0
    %1068 = vmatprep.subr.mxu0 0.0
    %1069 = vmatpush2.msra.mxu0 0.0
    %1070 = vmatprep.subr.mxu0 0.0
    %1071 = vmatpush2.msra.mxu0 0.0
    %1072 = vmatprep.subr.mxu0 0.0
    %1073 = vmatpush2.msra.mxu0 0.0
    %1074 = vmatprep.subr.mxu0 0.0
    %1075 = vmatpush2.msra.mxu0 0.0
    %1076 = vmatprep.subr.mxu0 0.0
    %1077 = vmatpush2.msra.mxu0 0.0
    %1078 = vmatprep.subr.mxu0 0.0
    %1079 = vmatpush2.msra.mxu0 0.0
    %1080 = vmatprep.mubr.f32.mxu0 0.0
    %1081 = vmatmul.mubr.f32.gmra.mxu0 %v1014
    %v1082 = vpop.f32.mrf.mxu0
    %v1083 = vadd.f32 %v1011, %v1082
    %v1084 = vpop.f32.mrf.mxu0
    %1085 = vdwg.mxu0
    %s1086 = scalar_lea.vmem %s5, 16
    %v1087 = vld [vmem:[%s1086] sm:$0xff]
    %v1089 = vsel %vm705, %v934, 0
    %1091 = vmatprep.subr.mxu0 0.0
    %1092 = vmatpush1.msra.mxu0 0.0
    %1093 = vmatprep.subr.mxu0 0.0
    %1094 = vmatpush1.msra.mxu0 0.0
    %1095 = vmatprep.subr.mxu0 0.0
    %1096 = vmatpush1.msra.mxu0 0.0
    %1097 = vmatprep.subr.mxu0 0.0
    %1098 = vmatpush1.msra.mxu0 0.0
    %1099 = vmatprep.subr.mxu0 0.0
    %1100 = vmatpush1.msra.mxu0 0.0
    %1101 = vmatprep.subr.mxu0 0.0
    %1102 = vmatpush1.msra.mxu0 0.0
    %1103 = vmatprep.subr.mxu0 0.0
    %1104 = vmatpush1.msra.mxu0 0.0
    %1105 = vmatprep.subr.mxu0 0.0
    %1106 = vmatpush1.msra.mxu0 0.0
    %1107 = vmatprep.subr.mxu0 0.0
    %1108 = vmatpush1.msra.mxu0 0.0
    %1109 = vmatprep.subr.mxu0 0.0
    %1110 = vmatpush1.msra.mxu0 0.0
    %1111 = vmatprep.subr.mxu0 0.0
    %1112 = vmatpush1.msra.mxu0 0.0
    %1113 = vmatprep.subr.mxu0 0.0
    %1114 = vmatpush1.msra.mxu0 0.0
    %1115 = vmatprep.subr.mxu0 0.0
    %1116 = vmatpush1.msra.mxu0 0.0
    %1117 = vmatprep.subr.mxu0 0.0
    %1118 = vmatpush1.msra.mxu0 0.0
    %1119 = vmatprep.subr.mxu0 0.0
    %1120 = vmatpush1.msra.mxu0 0.0
    %1121 = vmatprep.subr.mxu0 0.0
    %1122 = vmatpush1.msra.mxu0 %v1087
    %1123 = vmatprep.subr.mxu0 0.0
    %1124 = vmatpush2.msra.mxu0 0.0
    %1125 = vmatprep.subr.mxu0 0.0
    %1126 = vmatpush2.msra.mxu0 0.0
    %1127 = vmatprep.subr.mxu0 0.0
    %1128 = vmatpush2.msra.mxu0 0.0
    %1129 = vmatprep.subr.mxu0 0.0
    %1130 = vmatpush2.msra.mxu0 0.0
    %1131 = vmatprep.subr.mxu0 0.0
    %1132 = vmatpush2.msra.mxu0 0.0
    %1133 = vmatprep.subr.mxu0 0.0
    %1134 = vmatpush2.msra.mxu0 0.0
    %1135 = vmatprep.subr.mxu0 0.0
    %1136 = vmatpush2.msra.mxu0 0.0
    %1137 = vmatprep.subr.mxu0 0.0
    %1138 = vmatpush2.msra.mxu0 0.0
    %1139 = vmatprep.subr.mxu0 0.0
    %1140 = vmatpush2.msra.mxu0 0.0
    %1141 = vmatprep.subr.mxu0 0.0
    %1142 = vmatpush2.msra.mxu0 0.0
    %1143 = vmatprep.subr.mxu0 0.0
    %1144 = vmatpush2.msra.mxu0 0.0
    %1145 = vmatprep.subr.mxu0 0.0
    %1146 = vmatpush2.msra.mxu0 0.0
    %1147 = vmatprep.subr.mxu0 0.0
    %1148 = vmatpush2.msra.mxu0 0.0
    %1149 = vmatprep.subr.mxu0 0.0
    %1150 = vmatpush2.msra.mxu0 0.0
    %1151 = vmatprep.subr.mxu0 0.0
    %1152 = vmatpush2.msra.mxu0 0.0
    %1153 = vmatprep.subr.mxu0 0.0
    %1154 = vmatpush2.msra.mxu0 0.0
    %1155 = vmatprep.mubr.f32.mxu0 0.0
    %1156 = vmatmul.mubr.f32.gmra.mxu0 %v1089
    %v1157 = vpop.f32.mrf.mxu0
    %v1158 = vadd.f32 0.0, %v1157
    %v1159 = vpop.f32.mrf.mxu0
    %1160 = vdwg.mxu0
    %v1161 = vadd.f32 %v1083, %v1158
    %s1162 = scalar_lea.vmem %s2, 8
    %v1163 = vld [vmem:[%s1162] sm:$0xf]
    %1165 = vset.pattern.permute.xlu0 0
    %1166 = vperm.xlu0 %1165, %v1163
    %v1167 = vpop.permute.xlu0 %1166
    %v1169 = vadd.f32 %v1161, %v1167
    %v1170 = vmax.f32 %v1169, 0.0
    %v1171 = vld [vmem:[%s9] sm:$0xf]
    %v1173 = vsel %vm48, %v1170, 0
    %v1176 = vsel %vm55, %v1171, 0
    %1178 = vmatprep.subr.mxu0 0.0
    %1179 = vmatpush1.msra.mxu0 0.0
    %1180 = vmatprep.subr.mxu0 0.0
    %1181 = vmatpush1.msra.mxu0 0.0
    %1182 = vmatprep.subr.mxu0 0.0
    %1183 = vmatpush1.msra.mxu0 0.0
    %1184 = vmatprep.subr.mxu0 0.0
    %1185 = vmatpush1.msra.mxu0 0.0
    %1186 = vmatprep.subr.mxu0 0.0
    %1187 = vmatpush1.msra.mxu0 0.0
    %1188 = vmatprep.subr.mxu0 0.0
    %1189 = vmatpush1.msra.mxu0 0.0
    %1190 = vmatprep.subr.mxu0 0.0
    %1191 = vmatpush1.msra.mxu0 0.0
    %1192 = vmatprep.subr.mxu0 0.0
    %1193 = vmatpush1.msra.mxu0 0.0
    %1194 = vmatprep.subr.mxu0 0.0
    %1195 = vmatpush1.msra.mxu0 0.0
    %1196 = vmatprep.subr.mxu0 0.0
    %1197 = vmatpush1.msra.mxu0 0.0
    %1198 = vmatprep.subr.mxu0 0.0
    %1199 = vmatpush1.msra.mxu0 0.0
    %1200 = vmatprep.subr.mxu0 0.0
    %1201 = vmatpush1.msra.mxu0 0.0
    %1202 = vmatprep.subr.mxu0 0.0
    %1203 = vmatpush1.msra.mxu0 0.0
    %1204 = vmatprep.subr.mxu0 0.0
    %1205 = vmatpush1.msra.mxu0 0.0
    %1206 = vmatprep.subr.mxu0 0.0
    %1207 = vmatpush1.msra.mxu0 0.0
    %1208 = vmatprep.subr.mxu0 0.0
    %1209 = vmatpush1.msra.mxu0 %v1176
    %1210 = vmatprep.subr.mxu0 0.0
    %1211 = vmatpush2.msra.mxu0 0.0
    %1212 = vmatprep.subr.mxu0 0.0
    %1213 = vmatpush2.msra.mxu0 0.0
    %1214 = vmatprep.subr.mxu0 0.0
    %1215 = vmatpush2.msra.mxu0 0.0
    %1216 = vmatprep.subr.mxu0 0.0
    %1217 = vmatpush2.msra.mxu0 0.0
    %1218 = vmatprep.subr.mxu0 0.0
    %1219 = vmatpush2.msra.mxu0 0.0
    %1220 = vmatprep.subr.mxu0 0.0
    %1221 = vmatpush2.msra.mxu0 0.0
    %1222 = vmatprep.subr.mxu0 0.0
    %1223 = vmatpush2.msra.mxu0 0.0
    %1224 = vmatprep.subr.mxu0 0.0
    %1225 = vmatpush2.msra.mxu0 0.0
    %1226 = vmatprep.subr.mxu0 0.0
    %1227 = vmatpush2.msra.mxu0 0.0
    %1228 = vmatprep.subr.mxu0 0.0
    %1229 = vmatpush2.msra.mxu0 0.0
    %1230 = vmatprep.subr.mxu0 0.0
    %1231 = vmatpush2.msra.mxu0 0.0
    %1232 = vmatprep.subr.mxu0 0.0
    %1233 = vmatpush2.msra.mxu0 0.0
    %1234 = vmatprep.subr.mxu0 0.0
    %1235 = vmatpush2.msra.mxu0 0.0
    %1236 = vmatprep.subr.mxu0 0.0
    %1237 = vmatpush2.msra.mxu0 0.0
    %1238 = vmatprep.subr.mxu0 0.0
    %1239 = vmatpush2.msra.mxu0 0.0
    %1240 = vmatprep.subr.mxu0 0.0
    %1241 = vmatpush2.msra.mxu0 0.0
    %1242 = vmatprep.mubr.f32.mxu0 0.0
    %1243 = vmatmul.mubr.f32.gmra.mxu0 %v1173
    %v1244 = vpop.f32.mrf.mxu0
    %v1245 = vadd.f32 0.0, %v1244
    %v1246 = vpop.f32.mrf.mxu0
    %1247 = vdwg.mxu0
    %v1248 = vadd.f32 %v848, %v1245
    %s1249 = scalar_lea.vmem %s1, 48
    %v1250 = vld [vmem:[%s1249] sm:$0xff]
    %v1251 = vld [vmem:[%s1249 + $0x8] sm:$0xf]
    %v1253 = vsel %vm48, %v1250, 0
    %v1256 = vsel %vm48, %v1251, 0
    %v1258 = vsel %vm55, %v1170, 0
    %1260 = vmatprep.subr.mxu0 0.0
    %1261 = vmatpush1.msra.mxu0 0.0
    %1262 = vmatprep.subr.mxu0 0.0
    %1263 = vmatpush1.msra.mxu0 0.0
    %1264 = vmatprep.subr.mxu0 0.0
    %1265 = vmatpush1.msra.mxu0 0.0
    %1266 = vmatprep.subr.mxu0 0.0
    %1267 = vmatpush1.msra.mxu0 0.0
    %1268 = vmatprep.subr.mxu0 0.0
    %1269 = vmatpush1.msra.mxu0 0.0
    %1270 = vmatprep.subr.mxu0 0.0
    %1271 = vmatpush1.msra.mxu0 0.0
    %1272 = vmatprep.subr.mxu0 0.0
    %1273 = vmatpush1.msra.mxu0 0.0
    %1274 = vmatprep.subr.mxu0 0.0
    %1275 = vmatpush1.msra.mxu0 0.0
    %1276 = vmatprep.subr.mxu0 0.0
    %1277 = vmatpush1.msra.mxu0 0.0
    %1278 = vmatprep.subr.mxu0 0.0
    %1279 = vmatpush1.msra.mxu0 0.0
    %1280 = vmatprep.subr.mxu0 0.0
    %1281 = vmatpush1.msra.mxu0 0.0
    %1282 = vmatprep.subr.mxu0 0.0
    %1283 = vmatpush1.msra.mxu0 0.0
    %1284 = vmatprep.subr.mxu0 0.0
    %1285 = vmatpush1.msra.mxu0 0.0
    %1286 = vmatprep.subr.mxu0 0.0
    %1287 = vmatpush1.msra.mxu0 0.0
    %1288 = vmatprep.subr.mxu0 0.0
    %1289 = vmatpush1.msra.mxu0 0.0
    %1290 = vmatprep.subr.mxu0 0.0
    %1291 = vmatpush1.msra.mxu0 %v1258
    %1292 = vmatprep.subr.mxu0 0.0
    %1293 = vmatpush2.msra.mxu0 0.0
    %1294 = vmatprep.subr.mxu0 0.0
    %1295 = vmatpush2.msra.mxu0 0.0
    %1296 = vmatprep.subr.mxu0 0.0
    %1297 = vmatpush2.msra.mxu0 0.0
    %1298 = vmatprep.subr.mxu0 0.0
    %1299 = vmatpush2.msra.mxu0 0.0
    %1300 = vmatprep.subr.mxu0 0.0
    %1301 = vmatpush2.msra.mxu0 0.0
    %1302 = vmatprep.subr.mxu0 0.0
    %1303 = vmatpush2.msra.mxu0 0.0
    %1304 = vmatprep.subr.mxu0 0.0
    %1305 = vmatpush2.msra.mxu0 0.0
    %1306 = vmatprep.subr.mxu0 0.0
    %1307 = vmatpush2.msra.mxu0 0.0
    %1308 = vmatprep.subr.mxu0 0.0
    %1309 = vmatpush2.msra.mxu0 0.0
    %1310 = vmatprep.subr.mxu0 0.0
    %1311 = vmatpush2.msra.mxu0 0.0
    %1312 = vmatprep.subr.mxu0 0.0
    %1313 = vmatpush2.msra.mxu0 0.0
    %1314 = vmatprep.subr.mxu0 0.0
    %1315 = vmatpush2.msra.mxu0 0.0
    %1316 = vmatprep.subr.mxu0 0.0
    %1317 = vmatpush2.msra.mxu0 0.0
    %1318 = vmatprep.subr.mxu0 0.0
    %1319 = vmatpush2.msra.mxu0 0.0
    %1320 = vmatprep.subr.mxu0 0.0
    %1321 = vmatpush2.msra.mxu0 0.0
    %1322 = vmatprep.subr.mxu0 0.0
    %1323 = vmatpush2.msra.mxu0 0.0
    %1324 = vmatprep.mubr.f32.mxu0 0.0
    %1325 = vmatmul.mubr.f32.gmra.mxu0 %v1253
    %v1326 = vpop.f32.mrf.mxu0
    %v1327 = vadd.f32 0.0, %v1326
    %v1328 = vpop.f32.mrf.mxu0
    %1329 = vmatprep.mubr.f32.mxu0 0.0
    %1330 = vmatmul.mubr.f32.gmra.mxu0 %v1256
    %v1331 = vpop.f32.mrf.mxu0
    %v1332 = vadd.f32 0.0, %v1331
    %v1333 = vpop.f32.mrf.mxu0
    %1334 = vdwg.mxu0
    %v1335 = vld [vmem:[%s6] sm:$0xf]
    %s1336 = scalar_lea.vmem %s6, 4
    %v1337 = vld [vmem:[%s1336] sm:$0xf]
    %v1339 = vrot.slane %v1327, 4
    %v1340 = vsel %vm48, %v1339, 0
    %v1343 = vsel %vm55, %v1337, 0
    %1345 = vmatprep.subr.mxu0 0.0
    %1346 = vmatpush1.msra.mxu0 0.0
    %1347 = vmatprep.subr.mxu0 0.0
    %1348 = vmatpush1.msra.mxu0 0.0
    %1349 = vmatprep.subr.mxu0 0.0
    %1350 = vmatpush1.msra.mxu0 0.0
    %1351 = vmatprep.subr.mxu0 0.0
    %1352 = vmatpush1.msra.mxu0 0.0
    %1353 = vmatprep.subr.mxu0 0.0
    %1354 = vmatpush1.msra.mxu0 0.0
    %1355 = vmatprep.subr.mxu0 0.0
    %1356 = vmatpush1.msra.mxu0 0.0
    %1357 = vmatprep.subr.mxu0 0.0
    %1358 = vmatpush1.msra.mxu0 0.0
    %1359 = vmatprep.subr.mxu0 0.0
    %1360 = vmatpush1.msra.mxu0 0.0
    %1361 = vmatprep.subr.mxu0 0.0
    %1362 = vmatpush1.msra.mxu0 0.0
    %1363 = vmatprep.subr.mxu0 0.0
    %1364 = vmatpush1.msra.mxu0 0.0
    %1365 = vmatprep.subr.mxu0 0.0
    %1366 = vmatpush1.msra.mxu0 0.0
    %1367 = vmatprep.subr.mxu0 0.0
    %1368 = vmatpush1.msra.mxu0 0.0
    %1369 = vmatprep.subr.mxu0 0.0
    %1370 = vmatpush1.msra.mxu0 0.0
    %1371 = vmatprep.subr.mxu0 0.0
    %1372 = vmatpush1.msra.mxu0 0.0
    %1373 = vmatprep.subr.mxu0 0.0
    %1374 = vmatpush1.msra.mxu0 0.0
    %1375 = vmatprep.subr.mxu0 0.0
    %1376 = vmatpush1.msra.mxu0 %v1343
    %1377 = vmatprep.subr.mxu0 0.0
    %1378 = vmatpush2.msra.mxu0 0.0
    %1379 = vmatprep.subr.mxu0 0.0
    %1380 = vmatpush2.msra.mxu0 0.0
    %1381 = vmatprep.subr.mxu0 0.0
    %1382 = vmatpush2.msra.mxu0 0.0
    %1383 = vmatprep.subr.mxu0 0.0
    %1384 = vmatpush2.msra.mxu0 0.0
    %1385 = vmatprep.subr.mxu0 0.0
    %1386 = vmatpush2.msra.mxu0 0.0
    %1387 = vmatprep.subr.mxu0 0.0
    %1388 = vmatpush2.msra.mxu0 0.0
    %1389 = vmatprep.subr.mxu0 0.0
    %1390 = vmatpush2.msra.mxu0 0.0
    %1391 = vmatprep.subr.mxu0 0.0
    %1392 = vmatpush2.msra.mxu0 0.0
    %1393 = vmatprep.subr.mxu0 0.0
    %1394 = vmatpush2.msra.mxu0 0.0
    %1395 = vmatprep.subr.mxu0 0.0
    %1396 = vmatpush2.msra.mxu0 0.0
    %1397 = vmatprep.subr.mxu0 0.0
    %1398 = vmatpush2.msra.mxu0 0.0
    %1399 = vmatprep.subr.mxu0 0.0
    %1400 = vmatpush2.msra.mxu0 0.0
    %1401 = vmatprep.subr.mxu0 0.0
    %1402 = vmatpush2.msra.mxu0 0.0
    %1403 = vmatprep.subr.mxu0 0.0
    %1404 = vmatpush2.msra.mxu0 0.0
    %1405 = vmatprep.subr.mxu0 0.0
    %1406 = vmatpush2.msra.mxu0 0.0
    %1407 = vmatprep.subr.mxu0 0.0
    %1408 = vmatpush2.msra.mxu0 0.0
    %1409 = vmatprep.mubr.f32.mxu0 0.0
    %1410 = vmatmul.mubr.f32.gmra.mxu0 %v1340
    %v1411 = vpop.f32.mrf.mxu0
    %v1412 = vadd.f32 0.0, %v1411
    %v1413 = vpop.f32.mrf.mxu0
    %1414 = vdwg.mxu0
    %v1415 = vsel %vm48, %v1327, 0
    %v1418 = vsel %vm55, %v1335, 0
    %1420 = vmatprep.subr.mxu0 0.0
    %1421 = vmatpush1.msra.mxu0 0.0
    %1422 = vmatprep.subr.mxu0 0.0
    %1423 = vmatpush1.msra.mxu0 0.0
    %1424 = vmatprep.subr.mxu0 0.0
    %1425 = vmatpush1.msra.mxu0 0.0
    %1426 = vmatprep.subr.mxu0 0.0
    %1427 = vmatpush1.msra.mxu0 0.0
    %1428 = vmatprep.subr.mxu0 0.0
    %1429 = vmatpush1.msra.mxu0 0.0
    %1430 = vmatprep.subr.mxu0 0.0
    %1431 = vmatpush1.msra.mxu0 0.0
    %1432 = vmatprep.subr.mxu0 0.0
    %1433 = vmatpush1.msra.mxu0 0.0
    %1434 = vmatprep.subr.mxu0 0.0
    %1435 = vmatpush1.msra.mxu0 0.0
    %1436 = vmatprep.subr.mxu0 0.0
    %1437 = vmatpush1.msra.mxu0 0.0
    %1438 = vmatprep.subr.mxu0 0.0
    %1439 = vmatpush1.msra.mxu0 0.0
    %1440 = vmatprep.subr.mxu0 0.0
    %1441 = vmatpush1.msra.mxu0 0.0
    %1442 = vmatprep.subr.mxu0 0.0
    %1443 = vmatpush1.msra.mxu0 0.0
    %1444 = vmatprep.subr.mxu0 0.0
    %1445 = vmatpush1.msra.mxu0 0.0
    %1446 = vmatprep.subr.mxu0 0.0
    %1447 = vmatpush1.msra.mxu0 0.0
    %1448 = vmatprep.subr.mxu0 0.0
    %1449 = vmatpush1.msra.mxu0 0.0
    %1450 = vmatprep.subr.mxu0 0.0
    %1451 = vmatpush1.msra.mxu0 %v1418
    %1452 = vmatprep.subr.mxu0 0.0
    %1453 = vmatpush2.msra.mxu0 0.0
    %1454 = vmatprep.subr.mxu0 0.0
    %1455 = vmatpush2.msra.mxu0 0.0
    %1456 = vmatprep.subr.mxu0 0.0
    %1457 = vmatpush2.msra.mxu0 0.0
    %1458 = vmatprep.subr.mxu0 0.0
    %1459 = vmatpush2.msra.mxu0 0.0
    %1460 = vmatprep.subr.mxu0 0.0
    %1461 = vmatpush2.msra.mxu0 0.0
    %1462 = vmatprep.subr.mxu0 0.0
    %1463 = vmatpush2.msra.mxu0 0.0
    %1464 = vmatprep.subr.mxu0 0.0
    %1465 = vmatpush2.msra.mxu0 0.0
    %1466 = vmatprep.subr.mxu0 0.0
    %1467 = vmatpush2.msra.mxu0 0.0
    %1468 = vmatprep.subr.mxu0 0.0
    %1469 = vmatpush2.msra.mxu0 0.0
    %1470 = vmatprep.subr.mxu0 0.0
    %1471 = vmatpush2.msra.mxu0 0.0
    %1472 = vmatprep.subr.mxu0 0.0
    %1473 = vmatpush2.msra.mxu0 0.0
    %1474 = vmatprep.subr.mxu0 0.0
    %1475 = vmatpush2.msra.mxu0 0.0
    %1476 = vmatprep.subr.mxu0 0.0
    %1477 = vmatpush2.msra.mxu0 0.0
    %1478 = vmatprep.subr.mxu0 0.0
    %1479 = vmatpush2.msra.mxu0 0.0
    %1480 = vmatprep.subr.mxu0 0.0
    %1481 = vmatpush2.msra.mxu0 0.0
    %1482 = vmatprep.subr.mxu0 0.0
    %1483 = vmatpush2.msra.mxu0 0.0
    %1484 = vmatprep.mubr.f32.mxu0 0.0
    %1485 = vmatmul.mubr.f32.gmra.mxu0 %v1415
    %v1486 = vpop.f32.mrf.mxu0
    %v1487 = vadd.f32 %v1412, %v1486
    %v1488 = vpop.f32.mrf.mxu0
    %1489 = vdwg.mxu0
    %s1490 = scalar_lea.vmem %s6, 8
    %v1491 = vld [vmem:[%s1490] sm:$0xf]
    %v1493 = vsel %vm48, %v1332, 0
    %v1496 = vsel %vm55, %v1491, 0
    %1498 = vmatprep.subr.mxu0 0.0
    %1499 = vmatpush1.msra.mxu0 0.0
    %1500 = vmatprep.subr.mxu0 0.0
    %1501 = vmatpush1.msra.mxu0 0.0
    %1502 = vmatprep.subr.mxu0 0.0
    %1503 = vmatpush1.msra.mxu0 0.0
    %1504 = vmatprep.subr.mxu0 0.0
    %1505 = vmatpush1.msra.mxu0 0.0
    %1506 = vmatprep.subr.mxu0 0.0
    %1507 = vmatpush1.msra.mxu0 0.0
    %1508 = vmatprep.subr.mxu0 0.0
    %1509 = vmatpush1.msra.mxu0 0.0
    %1510 = vmatprep.subr.mxu0 0.0
    %1511 = vmatpush1.msra.mxu0 0.0
    %1512 = vmatprep.subr.mxu0 0.0
    %1513 = vmatpush1.msra.mxu0 0.0
    %1514 = vmatprep.subr.mxu0 0.0
    %1515 = vmatpush1.msra.mxu0 0.0
    %1516 = vmatprep.subr.mxu0 0.0
    %1517 = vmatpush1.msra.mxu0 0.0
    %1518 = vmatprep.subr.mxu0 0.0
    %1519 = vmatpush1.msra.mxu0 0.0
    %1520 = vmatprep.subr.mxu0 0.0
    %1521 = vmatpush1.msra.mxu0 0.0
    %1522 = vmatprep.subr.mxu0 0.0
    %1523 = vmatpush1.msra.mxu0 0.0
    %1524 = vmatprep.subr.mxu0 0.0
    %1525 = vmatpush1.msra.mxu0 0.0
    %1526 = vmatprep.subr.mxu0 0.0
    %1527 = vmatpush1.msra.mxu0 0.0
    %1528 = vmatprep.subr.mxu0 0.0
    %1529 = vmatpush1.msra.mxu0 %v1496
    %1530 = vmatprep.subr.mxu0 0.0
    %1531 = vmatpush2.msra.mxu0 0.0
    %1532 = vmatprep.subr.mxu0 0.0
    %1533 = vmatpush2.msra.mxu0 0.0
    %1534 = vmatprep.subr.mxu0 0.0
    %1535 = vmatpush2.msra.mxu0 0.0
    %1536 = vmatprep.subr.mxu0 0.0
    %1537 = vmatpush2.msra.mxu0 0.0
    %1538 = vmatprep.subr.mxu0 0.0
    %1539 = vmatpush2.msra.mxu0 0.0
    %1540 = vmatprep.subr.mxu0 0.0
    %1541 = vmatpush2.msra.mxu0 0.0
    %1542 = vmatprep.subr.mxu0 0.0
    %1543 = vmatpush2.msra.mxu0 0.0
    %1544 = vmatprep.subr.mxu0 0.0
    %1545 = vmatpush2.msra.mxu0 0.0
    %1546 = vmatprep.subr.mxu0 0.0
    %1547 = vmatpush2.msra.mxu0 0.0
    %1548 = vmatprep.subr.mxu0 0.0
    %1549 = vmatpush2.msra.mxu0 0.0
    %1550 = vmatprep.subr.mxu0 0.0
    %1551 = vmatpush2.msra.mxu0 0.0
    %1552 = vmatprep.subr.mxu0 0.0
    %1553 = vmatpush2.msra.mxu0 0.0
    %1554 = vmatprep.subr.mxu0 0.0
    %1555 = vmatpush2.msra.mxu0 0.0
    %1556 = vmatprep.subr.mxu0 0.0
    %1557 = vmatpush2.msra.mxu0 0.0
    %1558 = vmatprep.subr.mxu0 0.0
    %1559 = vmatpush2.msra.mxu0 0.0
    %1560 = vmatprep.subr.mxu0 0.0
    %1561 = vmatpush2.msra.mxu0 0.0
    %1562 = vmatprep.mubr.f32.mxu0 0.0
    %1563 = vmatmul.mubr.f32.gmra.mxu0 %v1493
    %v1564 = vpop.f32.mrf.mxu0
    %v1565 = vadd.f32 0.0, %v1564
    %v1566 = vpop.f32.mrf.mxu0
    %1567 = vdwg.mxu0
    %v1568 = vadd.f32 %v1487, %v1565
    %s1569 = scalar_lea.vmem %s2, 12
    %v1570 = vld [vmem:[%s1569] sm:$0xf]
    %1572 = vset.pattern.permute.xlu0 0
    %1573 = vperm.xlu0 %1572, %v1570
    %v1574 = vpop.permute.xlu0 %1573
    %v1576 = vadd.f32 %v1568, %v1574
    %v1577 = vmax.f32 %v1576, 0.0
    %v1578 = vld [vmem:[%s10] sm:$0xf]
    %v1580 = vsel %vm48, %v1577, 0
    %v1583 = vsel %vm55, %v1578, 0
    %1585 = vmatprep.subr.mxu0 0.0
    %1586 = vmatpush1.msra.mxu0 0.0
    %1587 = vmatprep.subr.mxu0 0.0
    %1588 = vmatpush1.msra.mxu0 0.0
    %1589 = vmatprep.subr.mxu0 0.0
    %1590 = vmatpush1.msra.mxu0 0.0
    %1591 = vmatprep.subr.mxu0 0.0
    %1592 = vmatpush1.msra.mxu0 0.0
    %1593 = vmatprep.subr.mxu0 0.0
    %1594 = vmatpush1.msra.mxu0 0.0
    %1595 = vmatprep.subr.mxu0 0.0
    %1596 = vmatpush1.msra.mxu0 0.0
    %1597 = vmatprep.subr.mxu0 0.0
    %1598 = vmatpush1.msra.mxu0 0.0
    %1599 = vmatprep.subr.mxu0 0.0
    %1600 = vmatpush1.msra.mxu0 0.0
    %1601 = vmatprep.subr.mxu0 0.0
    %1602 = vmatpush1.msra.mxu0 0.0
    %1603 = vmatprep.subr.mxu0 0.0
    %1604 = vmatpush1.msra.mxu0 0.0
    %1605 = vmatprep.subr.mxu0 0.0
    %1606 = vmatpush1.msra.mxu0 0.0
    %1607 = vmatprep.subr.mxu0 0.0
    %1608 = vmatpush1.msra.mxu0 0.0
    %1609 = vmatprep.subr.mxu0 0.0
    %1610 = vmatpush1.msra.mxu0 0.0
    %1611 = vmatprep.subr.mxu0 0.0
    %1612 = vmatpush1.msra.mxu0 0.0
    %1613 = vmatprep.subr.mxu0 0.0
    %1614 = vmatpush1.msra.mxu0 0.0
    %1615 = vmatprep.subr.mxu0 0.0
    %1616 = vmatpush1.msra.mxu0 %v1583
    %1617 = vmatprep.subr.mxu0 0.0
    %1618 = vmatpush2.msra.mxu0 0.0
    %1619 = vmatprep.subr.mxu0 0.0
    %1620 = vmatpush2.msra.mxu0 0.0
    %1621 = vmatprep.subr.mxu0 0.0
    %1622 = vmatpush2.msra.mxu0 0.0
    %1623 = vmatprep.subr.mxu0 0.0
    %1624 = vmatpush2.msra.mxu0 0.0
    %1625 = vmatprep.subr.mxu0 0.0
    %1626 = vmatpush2.msra.mxu0 0.0
    %1627 = vmatprep.subr.mxu0 0.0
    %1628 = vmatpush2.msra.mxu0 0.0
    %1629 = vmatprep.subr.mxu0 0.0
    %1630 = vmatpush2.msra.mxu0 0.0
    %1631 = vmatprep.subr.mxu0 0.0
    %1632 = vmatpush2.msra.mxu0 0.0
    %1633 = vmatprep.subr.mxu0 0.0
    %1634 = vmatpush2.msra.mxu0 0.0
    %1635 = vmatprep.subr.mxu0 0.0
    %1636 = vmatpush2.msra.mxu0 0.0
    %1637 = vmatprep.subr.mxu0 0.0
    %1638 = vmatpush2.msra.mxu0 0.0
    %1639 = vmatprep.subr.mxu0 0.0
    %1640 = vmatpush2.msra.mxu0 0.0
    %1641 = vmatprep.subr.mxu0 0.0
    %1642 = vmatpush2.msra.mxu0 0.0
    %1643 = vmatprep.subr.mxu0 0.0
    %1644 = vmatpush2.msra.mxu0 0.0
    %1645 = vmatprep.subr.mxu0 0.0
    %1646 = vmatpush2.msra.mxu0 0.0
    %1647 = vmatprep.subr.mxu0 0.0
    %1648 = vmatpush2.msra.mxu0 0.0
    %1649 = vmatprep.mubr.f32.mxu0 0.0
    %1650 = vmatmul.mubr.f32.gmra.mxu0 %v1580
    %v1651 = vpop.f32.mrf.mxu0
    %v1652 = vadd.f32 0.0, %v1651
    %v1653 = vpop.f32.mrf.mxu0
    %1654 = vdwg.mxu0
    %v1655 = vadd.f32 %v1248, %v1652
    %vm1656 = vcmask 257024
    %v1657 = vsel %vm1656, %v1655, 0.0
    %1658 = vadd.xlane.f32.xlu0 %v1657
    %v1659 = vpop.xlane.xlu0 %1658
    %v1660 = vrcp.pop 32.0
    %v1661 = vmul.f32 %v1659, %v1660
    %v1662 = vmul.f32 %v1655, %v1655
    %v1663 = vsel %vm1656, %v1662, 0.0
    %1664 = vadd.xlane.f32.xlu0 %v1663
    %v1665 = vpop.xlane.xlu0 %1664
    %v1666 = vmul.f32 %v1665, %v1660
    %v1667 = vmul.f32 %v1661, %v1661
    %v1668 = vsub.f32 %v1666, %v1667
    %v1669 = vadd.f32 %v1668, 1e-05
    %v1670 = vrsqrt.pop %v1669
    %v1671 = vsub.f32 %v1655, %v1661
    %v1672 = vmul.f32 %v1671, %v1670
    %v1673 = vld [vmem:[%s11] sm:$0xf]
    %1675 = vset.pattern.permute.xlu0 0
    %1676 = vperm.xlu0 %1675, %v1673
    %v1677 = vpop.permute.xlu0 %1676
    %v1679 = vmul.f32 %v1672, %v1677
    %v1680 = vld [vmem:[%s12] sm:$0xf]
    %1682 = vset.pattern.permute.xlu0 0
    %1683 = vperm.xlu0 %1682, %v1680
    %v1684 = vpop.permute.xlu0 %1683
    %v1686 = vadd.f32 %v1679, %v1684
    %1687 = vst.msk [vmem:[#allocation2] sm:$0xf] %vm1656, %v1686
    // Predicated region
    $region54: #{tpu_custom_call.1} parent=1 // pred_check
      _
    $region55: #{tpu_custom_call.1} parent=1 // pred_check_branch
      %1689 = sbr.rel (0) target = $region57
    $region56: #{tpu_custom_call.1} parent=1 // pred_region
      %s1691 = ssub.s32 64, 64
      %1692 = vsyncadd [#allocation3], %s1691
      %s1694 = sshll.u32 [#allocation2], 4
      %s1695 = int_to_ptr.vmem [resolvable:$true] %s1694
      %1697 = dma.vmem_to_hbm [thread:$0]  %s1695, 64, %s13, [#allocation3]
    $region57: #{tpu_custom_call.1} parent=1 // pred_fallthru
      _
    // Predicated region
    $region58: #{tpu_custom_call.1} parent=1 // pred_check
      _
    $region59: #{tpu_custom_call.1} parent=1 // pred_check_branch
      %1699 = sbr.rel (0) target = $region61
    $region60: #{tpu_custom_call.1} parent=1 // pred_region
      %1700 = dma.done [#allocation3], 64
    $region61: #{tpu_custom_call.1} parent=1 // pred_fallthru
      _
    %1701 = vsyncpa [#allocation3], 1

</llo_original>
